<compile_context>
chip_gen: v7x
topology: tpu7x:2x2x1
jax: 0.10.0
libtpu: 0.0.40
codegen_flags: <defaults>
</compile_context>

<pallas_src>
import jax
import jax.numpy as jnp
import numpy as np
from jax.experimental import pallas as pl
from jax.experimental.pallas import tpu as pltpu


# ----------------------------------------------------------------------------
# smooth_relu (the ICNN activation and the outer Lyapunov nonlinearity)
# ----------------------------------------------------------------------------
def smooth_relu_ref(v, d):
    r = jnp.maximum(v, 0.0)
    sq = (2.0 * d * r ** 3 - r ** 4) / (2.0 * d ** 3)
    lin = v - d / 2.0
    return jnp.where(r < d, sq, lin)


# ----------------------------------------------------------------------------
# Kernel factory
# ----------------------------------------------------------------------------
def _make_lyapunov_kernel(num_icnn_layers, smooth_d, eps, compute_dtype):
    inv_2d3 = 1.0 / (2.0 * smooth_d ** 3)

    def _smooth_relu(v):                      # f32 elementwise (VPU)
        r = jnp.maximum(v, 0.0)
        r2 = r * r
        sq = (2.0 * smooth_d * r2 * r - r2 * r2) * inv_2d3
        lin = v - 0.5 * smooth_d
        return jnp.where(r < smooth_d, sq, lin)

    def _mm(a, wt):
        # a: [TB, K] activations, wt: [K, N] (pre-transposed weight) -> [TB, N] f32
        return jnp.dot(a.astype(compute_dtype), wt.astype(compute_dtype),
                       preferred_element_type=jnp.float32)

    def kernel(*refs):
        x_ref, g0_ref = refs[0], refs[1]
        out1_ref, out2_ref = refs[-2], refs[-1]
        p = refs[2:-2]

        # ---- ICNN(x), smooth-ReLU activation, [TB, L_i] intermediates ----
        # (x_ref is re-read at each use; the tile is VMEM-resident, so this avoids
        #  keeping a [TB, d] value live across every matmul at large TB.)
        z = _smooth_relu(_mm(x_ref[...], p[0][...]) + p[1][...])       # [TB, L0]
        idx = 2
        for _ in range(1, num_icnn_layers):
            wt = p[idx][...]                  # [d, L_i]
            b = p[idx + 1][...]               # [1, L_i]  (f32)
            sut = p[idx + 2][...]             # [L_{i-1}, L_i]  (softplus precomputed)
            idx += 3
            z = _smooth_relu(_mm(x_ref[...], wt) + b + _mm(z, sut))
        g = z                                 # [TB, L_last] f32

        # ---- ControlNet(x): Linear-ReLU-Linear-ReLU-Linear ----
        h = jnp.maximum(_mm(x_ref[...], p[idx][...]) + p[idx + 1][...], 0.0)
        h = jnp.maximum(_mm(h, p[idx + 2][...]) + p[idx + 3][...], 0.0)
        u = _mm(h, p[idx + 4][...]) + p[idx + 5][...]                   # [TB, n_out] f32

        # ---- Lyapunov outputs ----
        xf = x_ref[...].astype(jnp.float32)                             # exact x (f32)
        sumsq = jnp.sum(xf * xf, axis=1, keepdims=True)                 # [TB, 1]
        out1 = _smooth_relu(g - g0_ref[...]) + eps * sumsq              # [TB, L_last]
        # Lane-dense store in the PyTorch layout: [L_last, TB] (TB multiple of 128).
        out1_ref[...] = out1.T.astype(out1_ref.dtype)
        out2_ref[...] = (u * xf).astype(out2_ref.dtype)
        # TODO(synk): ControlNet(zeros) is evaluated by the PyTorch module but never
        # used in its returned outputs, so it is intentionally not computed here.

    return kernel


# ----------------------------------------------------------------------------
# Wrapper
# ----------------------------------------------------------------------------
def _round_up(v, m):
    return (v + m - 1) // m * m


def lyapunov_forward(x, icnn_params, ctrl_params, *, smooth_d=0.1, eps=1e-3,
                     compute_dtype=jnp.float32, batch_tile=2048,
                     out1_dtype=jnp.float32):
    """Fused LyapunovFunction forward.

    Returns (out1, out2) with out1: [L_last, B] (PyTorch layout), out2: [B, n].
    """
    ws, bs, us = icnn_params
    x = jnp.asarray(x, jnp.float32)
    if x.ndim < 2:
        x = x[None, :]
    B, din = x.shape
    l_last = ws[-1].shape[0]
    n_out = ctrl_params[-1][0].shape[0]
    n_u = int(np.broadcast_shapes((n_out,), (din,))[0])

    # ---- batch-invariant precompute, hoisted out of the kernel (pure XLA) ----
    with jax.default_matmul_precision("float32"):
        sp_us = [jax.nn.softplus(jnp.asarray(u, jnp.float32)) for u in us]
        g0 = smooth_relu_ref(jnp.asarray(bs[0], jnp.float32).T, smooth_d)   # [1, L0]
        for i in range(len(us)):
            g0 = smooth_relu_ref(jnp.asarray(bs[i + 1], jnp.float32).T
                                 + g0 @ sp_us[i].T, smooth_d)
    g0 = g0.astype(jnp.float32)                                             # [1, L_last]

    # ---- batch tiling: 128-aligned tiles, weights resident, >=2 grid steps when
    #      the batch is large enough (v7x megacore sharding) ----
    B_ceil = _round_up(B, 128)
    TB = min(_round_up(max(int(batch_tile), 128), 128), B_ceil)
    if B_ceil >= 256 and B_ceil // TB < 2:
        TB = _round_up((B_ceil + 1) // 2, 128)
    B_pad = _round_up(B, TB)
    # x stays f32 into the kernel (only MXU operands get cast inside _mm).
    x_pad = x if B_pad == B else jnp.pad(x, ((0, B_pad - B), (0, 0)))

    def wcast(a):
        return jnp.asarray(a, jnp.float32).astype(compute_dtype)

    args = [x_pad]
    in_specs = [pl.BlockSpec((TB, din), lambda i: (i, 0))]     # streamed per tile

    def add_resident(a):
        a = jnp.asarray(a)
        args.append(a)
        # Constant index_map -> DMA'd once, stays VMEM-resident across grid steps.
        in_specs.append(pl.BlockSpec(a.shape, lambda i, _z=(0,) * a.ndim: _z))

    add_resident(g0)
    add_resident(wcast(ws[0].T))                                # [d, L0]
    add_resident(jnp.asarray(bs[0], jnp.float32).reshape(1, -1))
    for i in range(1, len(ws)):
        add_resident(wcast(ws[i].T))                            # [d, L_i]
        add_resident(jnp.asarray(bs[i], jnp.float32).reshape(1, -1))
        add_resident(wcast(sp_us[i - 1].T))                     # [L_{i-1}, L_i]
    for (w, b) in ctrl_params:
        add_resident(wcast(w.T))                                # [in, out]
        add_resident(jnp.asarray(b, jnp.float32).reshape(1, -1))

    kernel = _make_lyapunov_kernel(len(ws), float(smooth_d), float(eps), compute_dtype)

    out1, out2 = pl.pallas_call(
        kernel,
        grid=(B_pad // TB,),
        in_specs=in_specs,
        out_specs=(
            # out1 stored directly in PyTorch [L_last, B] layout, lane-dense (TB on lanes).
            pl.BlockSpec((l_last, TB), lambda i: (0, i)),
            pl.BlockSpec((TB, n_u), lambda i: (i, 0)),
        ),
        out_shape=(jax.ShapeDtypeStruct((l_last, B_pad), out1_dtype),
                   jax.ShapeDtypeStruct((B_pad, n_u), jnp.float32)),
        compiler_params=pltpu.CompilerParams(
            dimension_semantics=("parallel",),          # shards batch tiles on v7x 2 TCs
            vmem_limit_bytes=32 * 1024 * 1024),
    )(*args)

    if B_pad != B:
        out1 = out1[:, :B]
        out2 = out2[:B]
    return out1, out2


# ----------------------------------------------------------------------------
# Parameter init (mirrors the PyTorch module's parameter shapes)
# ----------------------------------------------------------------------------
def _xavier_normal(key, shape):
    fan_out, fan_in = shape
    std = float(np.sqrt(2.0 / (fan_in + fan_out)))
    return std * jax.random.normal(key, shape, dtype=jnp.float32)


def init_icnn_params(key, input_dim, layer_sizes):
    ws, bs, us = [], [], []
    keys = jax.random.split(key, 3 * len(layer_sizes))
    kit = iter(keys)
    ws.append(_xavier_normal(next(kit), (layer_sizes[0], input_dim)))
    bs.append(_xavier_normal(next(kit), (layer_sizes[0], 1)))
    for i in range(1, len(layer_sizes)):
        ws.append(_xavier_normal(next(kit), (layer_sizes[i], input_dim)))
        bs.append(_xavier_normal(next(kit), (layer_sizes[i], 1)))
        us.append(_xavier_normal(next(kit), (layer_sizes[i], layer_sizes[i - 1])))
    return ws, bs, us


def init_control_params(key, n_input, n_hidden, n_output):
    k1, k2, k3 = jax.random.split(key, 3)
    std = 0.001
    return [
        (std * jax.random.normal(k1, (n_hidden, n_input), jnp.float32),
         jnp.zeros((n_hidden,), jnp.float32)),
        (std * jax.random.normal(k2, (n_hidden, n_hidden), jnp.float32),
         jnp.zeros((n_hidden,), jnp.float32)),
        (std * jax.random.normal(k3, (n_output, n_hidden), jnp.float32),
         jnp.zeros((n_output,), jnp.float32)),
    ]


# ----------------------------------------------------------------------------
# Pure-JAX reference mirroring the PyTorch forward (for verification)
# ----------------------------------------------------------------------------
def lyapunov_reference(x, icnn_params, ctrl_params, smooth_d, eps):
    ws, bs, us = icnn_params
    x = jnp.asarray(x, jnp.float32)

    def icnn(xin):
        xt = xin.T                                           # [d, B]
        z = smooth_relu_ref(ws[0] @ xt + bs[0], smooth_d)
        for i in range(len(us)):
            sp_u = jax.nn.softplus(us[i])
            z = smooth_relu_ref(ws[i + 1] @ xt + bs[i + 1] + sp_u @ z, smooth_d)
        return z                                             # [L_last, B]

    def control(xin):
        (w1, b1), (w2, b2), (w3, b3) = ctrl_params
        h = jnp.maximum(xin @ w1.T + b1, 0.0)
        h = jnp.maximum(h @ w2.T + b2, 0.0)
        return h @ w3.T + b3

    g = icnn(x)
    g0 = icnn(jnp.zeros_like(x))
    u = control(x)
    out1 = smooth_relu_ref(g - g0, smooth_d) + eps * jnp.sum(x ** 2, axis=1)
    out2 = u * x
    return out1, out2


# ----------------------------------------------------------------------------
if __name__ == "__main__":
    key = jax.random.PRNGKey(0)
    k_icnn, k_ctrl, k_x, k_x2 = jax.random.split(key, 4)

    # LyapunovFunction(n_input, n_hidden, n_output, input_shape=(n_input,),
    #                  layer_sizes=[64, 64], smooth_relu_thresh=0.1, eps=1e-3)
    n_input, n_hidden, n_output = 3, 32, 3
    layer_sizes = [64, 64]
    smooth_d, eps = 0.1, 1e-3
    batch = 8

    icnn_params = init_icnn_params(k_icnn, n_input, layer_sizes)
    ctrl_params = init_control_params(k_ctrl, n_input, n_hidden, n_output)
    x = jax.random.normal(k_x, (batch, n_input), dtype=jnp.float32)

    # --- f32 path (exact module semantics) ---
    out1, out2 = lyapunov_forward(x, icnn_params, ctrl_params,
                                  smooth_d=smooth_d, eps=eps)
    out1, out2 = jax.block_until_ready((out1, out2))

    with jax.default_matmul_precision("float32"):
        ref1, ref2 = lyapunov_reference(x, icnn_params, ctrl_params, smooth_d, eps)
        ref1, ref2 = jax.block_until_ready((ref1, ref2))

    assert out1.shape == (layer_sizes[-1], batch), out1.shape
    assert out2.shape == (batch, n_input), out2.shape
    np.testing.assert_allclose(np.asarray(out1), np.asarray(ref1), rtol=1e-4, atol=1e-4)
    np.testing.assert_allclose(np.asarray(out2), np.asarray(ref2), rtol=1e-3, atol=1e-6)

    # --- multi-tile batch path (grid over B, resident weights, padded tail) ---
    xb = jax.random.normal(k_x2, (300, n_input), dtype=jnp.float32)
    ob1, ob2 = lyapunov_forward(xb, icnn_params, ctrl_params,
                                smooth_d=smooth_d, eps=eps, batch_tile=128)
    ob1, ob2 = jax.block_until_ready((ob1, ob2))
    with jax.default_matmul_precision("float32"):
        rb1, rb2 = lyapunov_reference(xb, icnn_params, ctrl_params, smooth_d, eps)
    np.testing.assert_allclose(np.asarray(ob1), np.asarray(rb1), rtol=1e-4, atol=1e-4)
    np.testing.assert_allclose(np.asarray(ob2), np.asarray(rb2), rtol=1e-3, atol=1e-6)

    # --- default (large) batch tile, exercising the >=2-grid-step clamp ---
    od1, od2 = lyapunov_forward(xb, icnn_params, ctrl_params,
                                smooth_d=smooth_d, eps=eps)
    od1, od2 = jax.block_until_ready((od1, od2))
    np.testing.assert_allclose(np.asarray(od1), np.asarray(rb1), rtol=1e-4, atol=1e-4)
    np.testing.assert_allclose(np.asarray(od2), np.asarray(rb2), rtol=1e-3, atol=1e-6)

    # --- bf16-weight fast path (v5e/v6e): x stays f32, weights/MXU operands bf16 ---
    o1b, o2b = lyapunov_forward(x, icnn_params, ctrl_params,
                                smooth_d=smooth_d, eps=eps,
                                compute_dtype=jnp.bfloat16)
    o1b, o2b = jax.block_until_ready((o1b, o2b))
    np.testing.assert_allclose(np.asarray(o1b), np.asarray(ref1), rtol=1e-1, atol=1e-1)
    np.testing.assert_allclose(np.asarray(o2b), np.asarray(ref2), rtol=1e-1, atol=1e-3)

    print("KERNEL_OK")
</pallas_src>

<mosaic_0001>
module attributes {stable_mosaic.version = 11 : i64} {
  func.func @kernel(%arg0: i32, %arg1: memref<128x3xf32, #tpu.memory_space<vmem>>, %arg2: memref<1x64xf32, #tpu.memory_space<vmem>>, %arg3: memref<3x64xf32, #tpu.memory_space<vmem>>, %arg4: memref<1x64xf32, #tpu.memory_space<vmem>>, %arg5: memref<3x64xf32, #tpu.memory_space<vmem>>, %arg6: memref<1x64xf32, #tpu.memory_space<vmem>>, %arg7: memref<64x64xf32, #tpu.memory_space<vmem>>, %arg8: memref<3x32xf32, #tpu.memory_space<vmem>>, %arg9: memref<1x32xf32, #tpu.memory_space<vmem>>, %arg10: memref<32x32xf32, #tpu.memory_space<vmem>>, %arg11: memref<1x32xf32, #tpu.memory_space<vmem>>, %arg12: memref<32x3xf32, #tpu.memory_space<vmem>>, %arg13: memref<1x3xf32, #tpu.memory_space<vmem>>, %arg14: memref<64x128xf32, #tpu.memory_space<vmem>>, %arg15: memref<128x3xf32, #tpu.memory_space<vmem>>) attributes {dimension_semantics = [#tpu.dimension_semantics<parallel>], iteration_bounds = array<i64: 1>, scalar_prefetch = 0 : i64, scratch_operands = 0 : i64, tpu.core_type = #tpu.core_type<tc>, window_params = [{transform_indices = @transform_0, window_bounds = array<i64: 128, 3>}, {pipeline_mode = #tpu.pipeline_mode<synchronous>, transform_indices = @transform_1, window_bounds = array<i64: 1, 64>}, {pipeline_mode = #tpu.pipeline_mode<synchronous>, transform_indices = @transform_2, window_bounds = array<i64: 3, 64>}, {pipeline_mode = #tpu.pipeline_mode<synchronous>, transform_indices = @transform_3, window_bounds = array<i64: 1, 64>}, {pipeline_mode = #tpu.pipeline_mode<synchronous>, transform_indices = @transform_4, window_bounds = array<i64: 3, 64>}, {pipeline_mode = #tpu.pipeline_mode<synchronous>, transform_indices = @transform_5, window_bounds = array<i64: 1, 64>}, {pipeline_mode = #tpu.pipeline_mode<synchronous>, transform_indices = @transform_6, window_bounds = array<i64: 64, 64>}, {pipeline_mode = #tpu.pipeline_mode<synchronous>, transform_indices = @transform_7, window_bounds = array<i64: 3, 32>}, {pipeline_mode = #tpu.pipeline_mode<synchronous>, transform_indices = @transform_8, window_bounds = array<i64: 1, 32>}, {pipeline_mode = #tpu.pipeline_mode<synchronous>, transform_indices = @transform_9, window_bounds = array<i64: 32, 32>}, {pipeline_mode = #tpu.pipeline_mode<synchronous>, transform_indices = @transform_10, window_bounds = array<i64: 1, 32>}, {pipeline_mode = #tpu.pipeline_mode<synchronous>, transform_indices = @transform_11, window_bounds = array<i64: 32, 3>}, {pipeline_mode = #tpu.pipeline_mode<synchronous>, transform_indices = @transform_12, window_bounds = array<i64: 1, 3>}, {transform_indices = @transform_13, window_bounds = array<i64: 64, 128>}, {transform_indices = @transform_14, window_bounds = array<i64: 128, 3>}]} {
    %c0 = arith.constant 0 : index
    %c0_0 = arith.constant 0 : index
    %0 = vector.load %arg1[%c0, %c0_0] : memref<128x3xf32, #tpu.memory_space<vmem>>, vector<128x3xf32>
    %c0_1 = arith.constant 0 : index
    %c0_2 = arith.constant 0 : index
    %1 = vector.load %arg3[%c0_1, %c0_2] : memref<3x64xf32, #tpu.memory_space<vmem>>, vector<3x64xf32>
    %cst = arith.constant dense<0.000000e+00> : vector<128x64xf32>
    %2 = tpu.matmul %0, %1, %cst {dimension_numbers = #tpu.dot_dimension_numbers<[1], [0], [0], [1], [0, 0, 1, 1], [], []>} : vector<128x3xf32>, vector<3x64xf32>, vector<128x64xf32> -> vector<128x64xf32>
    %c0_3 = arith.constant 0 : index
    %c0_4 = arith.constant 0 : index
    %3 = vector.load %arg4[%c0_3, %c0_4] : memref<1x64xf32, #tpu.memory_space<vmem>>, vector<1x64xf32>
    %4 = vector.broadcast %3 : vector<1x64xf32> to vector<128x64xf32>
    %5 = arith.addf %2, %4 : vector<128x64xf32>
    %cst_5 = arith.constant 0.000000e+00 : f32
    %6 = vector.broadcast %cst_5 : f32 to vector<128x64xf32>
    %7 = arith.maximumf %5, %6 : vector<128x64xf32>
    %8 = arith.mulf %7, %7 : vector<128x64xf32>
    %cst_6 = arith.constant 2.000000e-01 : f32
    %9 = vector.broadcast %cst_6 : f32 to vector<128x64xf32>
    %10 = arith.mulf %9, %8 : vector<128x64xf32>
    %11 = arith.mulf %10, %7 : vector<128x64xf32>
    %12 = arith.mulf %8, %8 : vector<128x64xf32>
    %13 = arith.subf %11, %12 : vector<128x64xf32>
    %cst_7 = arith.constant 5.000000e+02 : f32
    %14 = vector.broadcast %cst_7 : f32 to vector<128x64xf32>
    %15 = arith.mulf %13, %14 : vector<128x64xf32>
    %cst_8 = arith.constant 5.000000e-02 : f32
    %16 = vector.broadcast %cst_8 : f32 to vector<128x64xf32>
    %17 = arith.subf %5, %16 : vector<128x64xf32>
    %cst_9 = arith.constant 1.000000e-01 : f32
    %18 = vector.broadcast %cst_9 : f32 to vector<128x64xf32>
    %19 = arith.cmpf olt, %7, %18 : vector<128x64xf32>
    %20 = arith.select %19, %15, %17 : vector<128x64xi1>, vector<128x64xf32>
    %c0_10 = arith.constant 0 : index
    %c0_11 = arith.constant 0 : index
    %21 = vector.load %arg5[%c0_10, %c0_11] : memref<3x64xf32, #tpu.memory_space<vmem>>, vector<3x64xf32>
    %c0_12 = arith.constant 0 : index
    %c0_13 = arith.constant 0 : index
    %22 = vector.load %arg6[%c0_12, %c0_13] : memref<1x64xf32, #tpu.memory_space<vmem>>, vector<1x64xf32>
    %c0_14 = arith.constant 0 : index
    %c0_15 = arith.constant 0 : index
    %23 = vector.load %arg7[%c0_14, %c0_15] : memref<64x64xf32, #tpu.memory_space<vmem>>, vector<64x64xf32>
    %c0_16 = arith.constant 0 : index
    %c0_17 = arith.constant 0 : index
    %24 = vector.load %arg1[%c0_16, %c0_17] : memref<128x3xf32, #tpu.memory_space<vmem>>, vector<128x3xf32>
    %cst_18 = arith.constant dense<0.000000e+00> : vector<128x64xf32>
    %25 = tpu.matmul %24, %21, %cst_18 {dimension_numbers = #tpu.dot_dimension_numbers<[1], [0], [0], [1], [0, 0, 1, 1], [], []>} : vector<128x3xf32>, vector<3x64xf32>, vector<128x64xf32> -> vector<128x64xf32>
    %26 = vector.broadcast %22 : vector<1x64xf32> to vector<128x64xf32>
    %27 = arith.addf %25, %26 : vector<128x64xf32>
    %cst_19 = arith.constant dense<0.000000e+00> : vector<128x64xf32>
    %28 = tpu.matmul %20, %23, %cst_19 {dimension_numbers = #tpu.dot_dimension_numbers<[1], [0], [0], [1], [0, 0, 1, 1], [], []>} : vector<128x64xf32>, vector<64x64xf32>, vector<128x64xf32> -> vector<128x64xf32>
    %29 = arith.addf %27, %28 : vector<128x64xf32>
    %cst_20 = arith.constant 0.000000e+00 : f32
    %30 = vector.broadcast %cst_20 : f32 to vector<128x64xf32>
    %31 = arith.maximumf %29, %30 : vector<128x64xf32>
    %32 = arith.mulf %31, %31 : vector<128x64xf32>
    %cst_21 = arith.constant 2.000000e-01 : f32
    %33 = vector.broadcast %cst_21 : f32 to vector<128x64xf32>
    %34 = arith.mulf %33, %32 : vector<128x64xf32>
    %35 = arith.mulf %34, %31 : vector<128x64xf32>
    %36 = arith.mulf %32, %32 : vector<128x64xf32>
    %37 = arith.subf %35, %36 : vector<128x64xf32>
    %cst_22 = arith.constant 5.000000e+02 : f32
    %38 = vector.broadcast %cst_22 : f32 to vector<128x64xf32>
    %39 = arith.mulf %37, %38 : vector<128x64xf32>
    %cst_23 = arith.constant 5.000000e-02 : f32
    %40 = vector.broadcast %cst_23 : f32 to vector<128x64xf32>
    %41 = arith.subf %29, %40 : vector<128x64xf32>
    %cst_24 = arith.constant 1.000000e-01 : f32
    %42 = vector.broadcast %cst_24 : f32 to vector<128x64xf32>
    %43 = arith.cmpf olt, %31, %42 : vector<128x64xf32>
    %44 = arith.select %43, %39, %41 : vector<128x64xi1>, vector<128x64xf32>
    %c0_25 = arith.constant 0 : index
    %c0_26 = arith.constant 0 : index
    %45 = vector.load %arg1[%c0_25, %c0_26] : memref<128x3xf32, #tpu.memory_space<vmem>>, vector<128x3xf32>
    %c0_27 = arith.constant 0 : index
    %c0_28 = arith.constant 0 : index
    %46 = vector.load %arg8[%c0_27, %c0_28] : memref<3x32xf32, #tpu.memory_space<vmem>>, vector<3x32xf32>
    %cst_29 = arith.constant dense<0.000000e+00> : vector<128x32xf32>
    %47 = tpu.matmul %45, %46, %cst_29 {dimension_numbers = #tpu.dot_dimension_numbers<[1], [0], [0], [1], [0, 0, 1, 1], [], []>} : vector<128x3xf32>, vector<3x32xf32>, vector<128x32xf32> -> vector<128x32xf32>
    %c0_30 = arith.constant 0 : index
    %c0_31 = arith.constant 0 : index
    %48 = vector.load %arg9[%c0_30, %c0_31] : memref<1x32xf32, #tpu.memory_space<vmem>>, vector<1x32xf32>
    %49 = vector.broadcast %48 : vector<1x32xf32> to vector<128x32xf32>
    %50 = arith.addf %47, %49 : vector<128x32xf32>
    %cst_32 = arith.constant 0.000000e+00 : f32
    %51 = vector.broadcast %cst_32 : f32 to vector<128x32xf32>
    %52 = arith.maximumf %50, %51 : vector<128x32xf32>
    %c0_33 = arith.constant 0 : index
    %c0_34 = arith.constant 0 : index
    %53 = vector.load %arg10[%c0_33, %c0_34] : memref<32x32xf32, #tpu.memory_space<vmem>>, vector<32x32xf32>
    %cst_35 = arith.constant dense<0.000000e+00> : vector<128x32xf32>
    %54 = tpu.matmul %52, %53, %cst_35 {dimension_numbers = #tpu.dot_dimension_numbers<[1], [0], [0], [1], [0, 0, 1, 1], [], []>} : vector<128x32xf32>, vector<32x32xf32>, vector<128x32xf32> -> vector<128x32xf32>
    %c0_36 = arith.constant 0 : index
    %c0_37 = arith.constant 0 : index
    %55 = vector.load %arg11[%c0_36, %c0_37] : memref<1x32xf32, #tpu.memory_space<vmem>>, vector<1x32xf32>
    %56 = vector.broadcast %55 : vector<1x32xf32> to vector<128x32xf32>
    %57 = arith.addf %54, %56 : vector<128x32xf32>
    %cst_38 = arith.constant 0.000000e+00 : f32
    %58 = vector.broadcast %cst_38 : f32 to vector<128x32xf32>
    %59 = arith.maximumf %57, %58 : vector<128x32xf32>
    %c0_39 = arith.constant 0 : index
    %c0_40 = arith.constant 0 : index
    %60 = vector.load %arg12[%c0_39, %c0_40] : memref<32x3xf32, #tpu.memory_space<vmem>>, vector<32x3xf32>
    %cst_41 = arith.constant dense<0.000000e+00> : vector<128x3xf32>
    %61 = tpu.matmul %59, %60, %cst_41 {dimension_numbers = #tpu.dot_dimension_numbers<[1], [0], [0], [1], [0, 0, 1, 1], [], []>} : vector<128x32xf32>, vector<32x3xf32>, vector<128x3xf32> -> vector<128x3xf32>
    %c0_42 = arith.constant 0 : index
    %c0_43 = arith.constant 0 : index
    %62 = vector.load %arg13[%c0_42, %c0_43] : memref<1x3xf32, #tpu.memory_space<vmem>>, vector<1x3xf32>
    %63 = vector.broadcast %62 : vector<1x3xf32> to vector<128x3xf32>
    %64 = arith.addf %61, %63 : vector<128x3xf32>
    %c0_44 = arith.constant 0 : index
    %c0_45 = arith.constant 0 : index
    %65 = vector.load %arg1[%c0_44, %c0_45] : memref<128x3xf32, #tpu.memory_space<vmem>>, vector<128x3xf32>
    %66 = arith.mulf %65, %65 : vector<128x3xf32>
    %cst_46 = arith.constant dense<0.000000e+00> : vector<128xf32>
    %67 = vector.multi_reduction <add>, %66, %cst_46 [1] : vector<128x3xf32> to vector<128xf32>
    %68 = vector.shape_cast %67 : vector<128xf32> to vector<128x1xf32>
    %c0_47 = arith.constant 0 : index
    %c0_48 = arith.constant 0 : index
    %69 = vector.load %arg2[%c0_47, %c0_48] : memref<1x64xf32, #tpu.memory_space<vmem>>, vector<1x64xf32>
    %70 = vector.broadcast %69 : vector<1x64xf32> to vector<128x64xf32>
    %71 = arith.subf %44, %70 : vector<128x64xf32>
    %cst_49 = arith.constant 0.000000e+00 : f32
    %72 = vector.broadcast %cst_49 : f32 to vector<128x64xf32>
    %73 = arith.maximumf %71, %72 : vector<128x64xf32>
    %74 = arith.mulf %73, %73 : vector<128x64xf32>
    %cst_50 = arith.constant 2.000000e-01 : f32
    %75 = vector.broadcast %cst_50 : f32 to vector<128x64xf32>
    %76 = arith.mulf %75, %74 : vector<128x64xf32>
    %77 = arith.mulf %76, %73 : vector<128x64xf32>
    %78 = arith.mulf %74, %74 : vector<128x64xf32>
    %79 = arith.subf %77, %78 : vector<128x64xf32>
    %cst_51 = arith.constant 5.000000e+02 : f32
    %80 = vector.broadcast %cst_51 : f32 to vector<128x64xf32>
    %81 = arith.mulf %79, %80 : vector<128x64xf32>
    %cst_52 = arith.constant 5.000000e-02 : f32
    %82 = vector.broadcast %cst_52 : f32 to vector<128x64xf32>
    %83 = arith.subf %71, %82 : vector<128x64xf32>
    %cst_53 = arith.constant 1.000000e-01 : f32
    %84 = vector.broadcast %cst_53 : f32 to vector<128x64xf32>
    %85 = arith.cmpf olt, %73, %84 : vector<128x64xf32>
    %86 = arith.select %85, %81, %83 : vector<128x64xi1>, vector<128x64xf32>
    %cst_54 = arith.constant 1.000000e-03 : f32
    %87 = vector.broadcast %cst_54 : f32 to vector<128x1xf32>
    %88 = arith.mulf %87, %68 : vector<128x1xf32>
    %89 = vector.broadcast %88 : vector<128x1xf32> to vector<128x64xf32>
    %90 = arith.addf %86, %89 : vector<128x64xf32>
    %91 = tpu.transpose %90, [1, 0] : vector<128x64xf32> -> vector<64x128xf32>
    %c0_55 = arith.constant 0 : index
    %c0_56 = arith.constant 0 : index
    %92 = vector.load %arg14[%c0_55, %c0_56] : memref<64x128xf32, #tpu.memory_space<vmem>>, vector<64x128xf32>
    tpu.vector_store %arg14[%c0_55, %c0_56], %91 {strides = array<i32>} : memref<64x128xf32, #tpu.memory_space<vmem>>, vector<64x128xf32>,
    %93 = arith.mulf %64, %65 : vector<128x3xf32>
    %c0_57 = arith.constant 0 : index
    %c0_58 = arith.constant 0 : index
    %94 = vector.load %arg15[%c0_57, %c0_58] : memref<128x3xf32, #tpu.memory_space<vmem>>, vector<128x3xf32>
    tpu.vector_store %arg15[%c0_57, %c0_58], %93 {strides = array<i32>} : memref<128x3xf32, #tpu.memory_space<vmem>>, vector<128x3xf32>,
    return
  }
  func.func @transform_0(%arg0: i32) -> (i32, i32) {
    %c0_i32 = arith.constant 0 : i32
    %c0_i32_0 = arith.constant 0 : i32
    return %arg0, %c0_i32 : i32, i32
  }
  func.func @transform_1(%arg0: i32) -> (i32, i32) {
    %c0_i32 = arith.constant 0 : i32
    %c0_i32_0 = arith.constant 0 : i32
    %c0_i32_1 = arith.constant 0 : i32
    return %c0_i32, %c0_i32_0 : i32, i32
  }
  func.func @transform_2(%arg0: i32) -> (i32, i32) {
    %c0_i32 = arith.constant 0 : i32
    %c0_i32_0 = arith.constant 0 : i32
    %c0_i32_1 = arith.constant 0 : i32
    return %c0_i32, %c0_i32_0 : i32, i32
  }
  func.func @transform_3(%arg0: i32) -> (i32, i32) {
    %c0_i32 = arith.constant 0 : i32
    %c0_i32_0 = arith.constant 0 : i32
    %c0_i32_1 = arith.constant 0 : i32
    return %c0_i32, %c0_i32_0 : i32, i32
  }
  func.func @transform_4(%arg0: i32) -> (i32, i32) {
    %c0_i32 = arith.constant 0 : i32
    %c0_i32_0 = arith.constant 0 : i32
    %c0_i32_1 = arith.constant 0 : i32
    return %c0_i32, %c0_i32_0 : i32, i32
  }
  func.func @transform_5(%arg0: i32) -> (i32, i32) {
    %c0_i32 = arith.constant 0 : i32
    %c0_i32_0 = arith.constant 0 : i32
    %c0_i32_1 = arith.constant 0 : i32
    return %c0_i32, %c0_i32_0 : i32, i32
  }
  func.func @transform_6(%arg0: i32) -> (i32, i32) {
    %c0_i32 = arith.constant 0 : i32
    %c0_i32_0 = arith.constant 0 : i32
    %c0_i32_1 = arith.constant 0 : i32
    return %c0_i32, %c0_i32_0 : i32, i32
  }
  func.func @transform_7(%arg0: i32) -> (i32, i32) {
    %c0_i32 = arith.constant 0 : i32
    %c0_i32_0 = arith.constant 0 : i32
    %c0_i32_1 = arith.constant 0 : i32
    return %c0_i32, %c0_i32_0 : i32, i32
  }
  func.func @transform_8(%arg0: i32) -> (i32, i32) {
    %c0_i32 = arith.constant 0 : i32
    %c0_i32_0 = arith.constant 0 : i32
    %c0_i32_1 = arith.constant 0 : i32
    return %c0_i32, %c0_i32_0 : i32, i32
  }
  func.func @transform_9(%arg0: i32) -> (i32, i32) {
    %c0_i32 = arith.constant 0 : i32
    %c0_i32_0 = arith.constant 0 : i32
    %c0_i32_1 = arith.constant 0 : i32
    return %c0_i32, %c0_i32_0 : i32, i32
  }
  func.func @transform_10(%arg0: i32) -> (i32, i32) {
    %c0_i32 = arith.constant 0 : i32
    %c0_i32_0 = arith.constant 0 : i32
    %c0_i32_1 = arith.constant 0 : i32
    return %c0_i32, %c0_i32_0 : i32, i32
  }
  func.func @transform_11(%arg0: i32) -> (i32, i32) {
    %c0_i32 = arith.constant 0 : i32
    %c0_i32_0 = arith.constant 0 : i32
    %c0_i32_1 = arith.constant 0 : i32
    return %c0_i32, %c0_i32_0 : i32, i32
  }
  func.func @transform_12(%arg0: i32) -> (i32, i32) {
    %c0_i32 = arith.constant 0 : i32
    %c0_i32_0 = arith.constant 0 : i32
    %c0_i32_1 = arith.constant 0 : i32
    return %c0_i32, %c0_i32_0 : i32, i32
  }
  func.func @transform_13(%arg0: i32) -> (i32, i32) {
    %c0_i32 = arith.constant 0 : i32
    %c0_i32_0 = arith.constant 0 : i32
    return %c0_i32, %arg0 : i32, i32
  }
  func.func @transform_14(%arg0: i32) -> (i32, i32) {
    %c0_i32 = arith.constant 0 : i32
    %c0_i32_0 = arith.constant 0 : i32
    return %arg0, %c0_i32 : i32, i32
  }
}

</mosaic_0001>

<llo_original>
// kernel: tpu_custom_call.1
$region0: #{tpu_custom_call.1}
  #allocation0 [shape = 'u32[]', space=smem, size = 0x4, offset = 0x4, fixed_abs, tag = 'smem constant byte address 0x4 - core index']
  #allocation1 [shape = 'u32[144,128]{1,0:T(1,128)}', space=vmem, size = 0x12000, scoped, tag = 'internal scratch']
  %s0 = inlined_call_operand.vmem [shape: f32[128,3], index: 0, kind: input, shape index: {}]
  %s1 = inlined_call_operand.vmem [shape: f32[1,64], index: 1, kind: input, shape index: {}]
  %s2 = inlined_call_operand.vmem [shape: f32[3,64], index: 2, kind: input, shape index: {}]
  %s3 = inlined_call_operand.vmem [shape: f32[1,64], index: 3, kind: input, shape index: {}]
  %s4 = inlined_call_operand.vmem [shape: f32[3,64], index: 4, kind: input, shape index: {}]
  %s5 = inlined_call_operand.vmem [shape: f32[1,64], index: 5, kind: input, shape index: {}]
  %s6 = inlined_call_operand.vmem [shape: f32[64,64], index: 6, kind: input, shape index: {}]
  %s7 = inlined_call_operand.vmem [shape: f32[3,32], index: 7, kind: input, shape index: {}]
  %s8 = inlined_call_operand.vmem [shape: f32[1,32], index: 8, kind: input, shape index: {}]
  %s9 = inlined_call_operand.vmem [shape: f32[32,32], index: 9, kind: input, shape index: {}]
  %s10 = inlined_call_operand.vmem [shape: f32[1,32], index: 10, kind: input, shape index: {}]
  %s11 = inlined_call_operand.vmem [shape: f32[32,3], index: 11, kind: input, shape index: {}]
  %s12 = inlined_call_operand.vmem [shape: f32[1,3], index: 12, kind: input, shape index: {}]
  %s13 = inlined_call_operand.hbm [shape: f32[64,128], index: 13, kind: output, shape index: {0}]
  %s14 = inlined_call_operand.vmem [shape: f32[128,3], index: 14, kind: output, shape index: {1}]
  %15 = xla_tuple %s13, %s14
  %s16 = sld [smem:[#allocation0]]
  $region70: #{tpu_custom_call.1} parent=0
    _
  %s18 = ssub.s32 1, %s16
  %s19 = scalar_select 0, %s18, %s16
  $region1: #{tpu_custom_call.1} parent=0
    #allocation2 [shape = 'u8[32768]{0}', space=vmem, size = 0x8000, scoped, tag = 'output window, operand 0, single buffered']
    #allocation3 [shape = 's32[1]{0}', space=sflag, size = 0x4, scoped, tag = 'scoped memory for tpu_custom_call.1']
    %20 = vsyncpa [#allocation3], 0
    // Predicated region
    $region2: #{tpu_custom_call.1} parent=1 // pred_check
      _
    $region3: #{tpu_custom_call.1} parent=1 // pred_check_branch
      %22 = sbr.rel (0) target = $region5
    $region4: #{tpu_custom_call.1} parent=1 // pred_region
      _
    $region5: #{tpu_custom_call.1} parent=1 // pred_fallthru
      _
    // Predicated region
    $region6: #{tpu_custom_call.1} parent=1 // pred_check
      _
    $region7: #{tpu_custom_call.1} parent=1 // pred_check_branch
      %24 = sbr.rel (0) target = $region9
    $region8: #{tpu_custom_call.1} parent=1 // pred_region
      _
    $region9: #{tpu_custom_call.1} parent=1 // pred_fallthru
      _
    // Predicated region
    $region10: #{tpu_custom_call.1} parent=1 // pred_check
      _
    $region11: #{tpu_custom_call.1} parent=1 // pred_check_branch
      %26 = sbr.rel (0) target = $region13
    $region12: #{tpu_custom_call.1} parent=1 // pred_region
      _
    $region13: #{tpu_custom_call.1} parent=1 // pred_fallthru
      _
    // Predicated region
    $region14: #{tpu_custom_call.1} parent=1 // pred_check
      _
    $region15: #{tpu_custom_call.1} parent=1 // pred_check_branch
      %28 = sbr.rel (0) target = $region17
    $region16: #{tpu_custom_call.1} parent=1 // pred_region
      _
    $region17: #{tpu_custom_call.1} parent=1 // pred_fallthru
      _
    // Predicated region
    $region18: #{tpu_custom_call.1} parent=1 // pred_check
      _
    $region19: #{tpu_custom_call.1} parent=1 // pred_check_branch
      %30 = sbr.rel (0) target = $region21
    $region20: #{tpu_custom_call.1} parent=1 // pred_region
      _
    $region21: #{tpu_custom_call.1} parent=1 // pred_fallthru
      _
    // Predicated region
    $region22: #{tpu_custom_call.1} parent=1 // pred_check
      _
    $region23: #{tpu_custom_call.1} parent=1 // pred_check_branch
      %32 = sbr.rel (0) target = $region25
    $region24: #{tpu_custom_call.1} parent=1 // pred_region
      _
    $region25: #{tpu_custom_call.1} parent=1 // pred_fallthru
      _
    // Predicated region
    $region26: #{tpu_custom_call.1} parent=1 // pred_check
      _
    $region27: #{tpu_custom_call.1} parent=1 // pred_check_branch
      %34 = sbr.rel (0) target = $region29
    $region28: #{tpu_custom_call.1} parent=1 // pred_region
      _
    $region29: #{tpu_custom_call.1} parent=1 // pred_fallthru
      _
    // Predicated region
    $region30: #{tpu_custom_call.1} parent=1 // pred_check
      _
    $region31: #{tpu_custom_call.1} parent=1 // pred_check_branch
      %36 = sbr.rel (0) target = $region33
    $region32: #{tpu_custom_call.1} parent=1 // pred_region
      _
    $region33: #{tpu_custom_call.1} parent=1 // pred_fallthru
      _
    // Predicated region
    $region34: #{tpu_custom_call.1} parent=1 // pred_check
      _
    $region35: #{tpu_custom_call.1} parent=1 // pred_check_branch
      %38 = sbr.rel (0) target = $region37
    $region36: #{tpu_custom_call.1} parent=1 // pred_region
      _
    $region37: #{tpu_custom_call.1} parent=1 // pred_fallthru
      _
    // Predicated region
    $region38: #{tpu_custom_call.1} parent=1 // pred_check
      _
    $region39: #{tpu_custom_call.1} parent=1 // pred_check_branch
      %40 = sbr.rel (0) target = $region41
    $region40: #{tpu_custom_call.1} parent=1 // pred_region
      _
    $region41: #{tpu_custom_call.1} parent=1 // pred_fallthru
      _
    // Predicated region
    $region42: #{tpu_custom_call.1} parent=1 // pred_check
      _
    $region43: #{tpu_custom_call.1} parent=1 // pred_check_branch
      %42 = sbr.rel (0) target = $region45
    $region44: #{tpu_custom_call.1} parent=1 // pred_region
      _
    $region45: #{tpu_custom_call.1} parent=1 // pred_fallthru
      _
    // Predicated region
    $region46: #{tpu_custom_call.1} parent=1 // pred_check
      _
    $region47: #{tpu_custom_call.1} parent=1 // pred_check_branch
      %44 = sbr.rel (0) target = $region49
    $region48: #{tpu_custom_call.1} parent=1 // pred_region
      _
    $region49: #{tpu_custom_call.1} parent=1 // pred_fallthru
      _
    // Predicated region
    $region50: #{tpu_custom_call.1} parent=1 // pred_check
      _
    $region51: #{tpu_custom_call.1} parent=1 // pred_check_branch
      %46 = sbr.rel (0) target = $region53
    $region52: #{tpu_custom_call.1} parent=1 // pred_region
      _
    $region53: #{tpu_custom_call.1} parent=1 // pred_fallthru
      _
    %v47 = vld [vmem:[%s0] sm:$0xff]
    %v48 = vld [vmem:[%s0 + $0x8] sm:$0xff]
    %v49 = vld [vmem:[%s0 + $0x10] sm:$0xff]
    %v50 = vld [vmem:[%s0 + $0x18] sm:$0xff]
    %v51 = vld [vmem:[%s0 + $0x20] sm:$0xff]
    %v52 = vld [vmem:[%s0 + $0x28] sm:$0xff]
    %v53 = vld [vmem:[%s0 + $0x30] sm:$0xff]
    %v54 = vld [vmem:[%s0 + $0x38] sm:$0xff]
    %v55 = vld [vmem:[%s0 + $0x40] sm:$0xff]
    %v56 = vld [vmem:[%s0 + $0x48] sm:$0xff]
    %v57 = vld [vmem:[%s0 + $0x50] sm:$0xff]
    %v58 = vld [vmem:[%s0 + $0x58] sm:$0xff]
    %v59 = vld [vmem:[%s0 + $0x60] sm:$0xff]
    %v60 = vld [vmem:[%s0 + $0x68] sm:$0xff]
    %v61 = vld [vmem:[%s0 + $0x70] sm:$0xff]
    %v62 = vld [vmem:[%s0 + $0x78] sm:$0xff]
    %v63 = vld [vmem:[%s2] sm:$0x7]
    %v64 = vld [vmem:[%s3] sm:$0x1]
    %v66 = vlaneseq
    %v67 = vshrl.u32 %v66, 7
    %v68 = vsub.s32 0, %v67
    %v69 = vrot.slane %v64, %v68
    %vm71 = vcmask 23552
    %v73 = vsel %vm71, %v47, 0
    %v76 = vsel %vm71, %v48, 0
    %v79 = vsel %vm71, %v49, 0
    %v82 = vsel %vm71, %v50, 0
    %v85 = vsel %vm71, %v51, 0
    %v88 = vsel %vm71, %v52, 0
    %v91 = vsel %vm71, %v53, 0
    %v94 = vsel %vm71, %v54, 0
    %v97 = vsel %vm71, %v55, 0
    %v100 = vsel %vm71, %v56, 0
    %v103 = vsel %vm71, %v57, 0
    %v106 = vsel %vm71, %v58, 0
    %v109 = vsel %vm71, %v59, 0
    %v112 = vsel %vm71, %v60, 0
    %v115 = vsel %vm71, %v61, 0
    %v118 = vsel %vm71, %v62, 0
    %vm120 = vcmask 1042432
    %v122 = vsel %vm120, %v63, 0
    %124 = vmatprep.subr.mxu0 0.0
    %125 = vmatpush1.msra.mxu0 %v122
    %126 = vmatprep.subr.mxu0 0.0
    %127 = vmatpush1.msra.mxu0 0.0
    %128 = vmatprep.subr.mxu0 0.0
    %129 = vmatpush1.msra.mxu0 0.0
    %130 = vmatprep.subr.mxu0 0.0
    %131 = vmatpush1.msra.mxu0 0.0
    %132 = vmatprep.subr.mxu0 0.0
    %133 = vmatpush1.msra.mxu0 0.0
    %134 = vmatprep.subr.mxu0 0.0
    %135 = vmatpush1.msra.mxu0 0.0
    %136 = vmatprep.subr.mxu0 0.0
    %137 = vmatpush1.msra.mxu0 0.0
    %138 = vmatprep.subr.mxu0 0.0
    %139 = vmatpush1.msra.mxu0 0.0
    %140 = vmatprep.subr.mxu0 0.0
    %141 = vmatpush1.msra.mxu0 0.0
    %142 = vmatprep.subr.mxu0 0.0
    %143 = vmatpush1.msra.mxu0 0.0
    %144 = vmatprep.subr.mxu0 0.0
    %145 = vmatpush1.msra.mxu0 0.0
    %146 = vmatprep.subr.mxu0 0.0
    %147 = vmatpush1.msra.mxu0 0.0
    %148 = vmatprep.subr.mxu0 0.0
    %149 = vmatpush1.msra.mxu0 0.0
    %150 = vmatprep.subr.mxu0 0.0
    %151 = vmatpush1.msra.mxu0 0.0
    %152 = vmatprep.subr.mxu0 0.0
    %153 = vmatpush1.msra.mxu0 0.0
    %154 = vmatprep.subr.mxu0 0.0
    %155 = vmatpush1.msra.mxu0 0.0
    %156 = vmatprep.subr.mxu0 0.0
    %157 = vmatpush1.msra.mxu0 0.0
    %158 = vmatprep.subr.mxu0 0.0
    %159 = vmatpush1.msra.mxu0 0.0
    %160 = vmatprep.subr.mxu0 0.0
    %161 = vmatpush1.msra.mxu0 0.0
    %162 = vmatprep.subr.mxu0 0.0
    %163 = vmatpush1.msra.mxu0 0.0
    %164 = vmatprep.subr.mxu0 0.0
    %165 = vmatpush1.msra.mxu0 0.0
    %166 = vmatprep.subr.mxu0 0.0
    %167 = vmatpush1.msra.mxu0 0.0
    %168 = vmatprep.subr.mxu0 0.0
    %169 = vmatpush1.msra.mxu0 0.0
    %170 = vmatprep.subr.mxu0 0.0
    %171 = vmatpush1.msra.mxu0 0.0
    %172 = vmatprep.subr.mxu0 0.0
    %173 = vmatpush1.msra.mxu0 0.0
    %174 = vmatprep.subr.mxu0 0.0
    %175 = vmatpush1.msra.mxu0 0.0
    %176 = vmatprep.subr.mxu0 0.0
    %177 = vmatpush1.msra.mxu0 0.0
    %178 = vmatprep.subr.mxu0 0.0
    %179 = vmatpush1.msra.mxu0 0.0
    %180 = vmatprep.subr.mxu0 0.0
    %181 = vmatpush1.msra.mxu0 0.0
    %182 = vmatprep.subr.mxu0 0.0
    %183 = vmatpush1.msra.mxu0 0.0
    %184 = vmatprep.subr.mxu0 0.0
    %185 = vmatpush1.msra.mxu0 0.0
    %186 = vmatprep.subr.mxu0 0.0
    %187 = vmatpush1.msra.mxu0 0.0
    %188 = vmatprep.mubr.f32.mxu0 0.0
    %189 = vmatmul.mubr.f32.gmra.mrb[0].mxu0 %v73
    %v190 = vpop.f32.mrb[0].mxu0
    %v191 = vadd.f32 %v69, %v190
    %v192 = vpop.f32.mrb[0].mxu0
    %193 = vmatprep.mubr.f32.mxu0 0.0
    %194 = vmatmul.mubr.f32.gmra.mrb[0].mxu0 %v76
    %v195 = vpop.f32.mrb[0].mxu0
    %v196 = vadd.f32 %v69, %v195
    %v197 = vpop.f32.mrb[0].mxu0
    %198 = vmatprep.mubr.f32.mxu0 0.0
    %199 = vmatmul.mubr.f32.gmra.mrb[0].mxu0 %v79
    %v200 = vpop.f32.mrb[0].mxu0
    %v201 = vadd.f32 %v69, %v200
    %v202 = vpop.f32.mrb[0].mxu0
    %203 = vmatprep.mubr.f32.mxu0 0.0
    %204 = vmatmul.mubr.f32.gmra.mrb[0].mxu0 %v82
    %v205 = vpop.f32.mrb[0].mxu0
    %v206 = vadd.f32 %v69, %v205
    %v207 = vpop.f32.mrb[0].mxu0
    %208 = vmatprep.mubr.f32.mxu0 0.0
    %209 = vmatmul.mubr.f32.gmra.mrb[0].mxu0 %v85
    %v210 = vpop.f32.mrb[0].mxu0
    %v211 = vadd.f32 %v69, %v210
    %v212 = vpop.f32.mrb[0].mxu0
    %213 = vmatprep.mubr.f32.mxu0 0.0
    %214 = vmatmul.mubr.f32.gmra.mrb[0].mxu0 %v88
    %v215 = vpop.f32.mrb[0].mxu0
    %v216 = vadd.f32 %v69, %v215
    %v217 = vpop.f32.mrb[0].mxu0
    %218 = vmatprep.mubr.f32.mxu0 0.0
    %219 = vmatmul.mubr.f32.gmra.mrb[0].mxu0 %v91
    %v220 = vpop.f32.mrb[0].mxu0
    %v221 = vadd.f32 %v69, %v220
    %v222 = vpop.f32.mrb[0].mxu0
    %223 = vmatprep.mubr.f32.mxu0 0.0
    %224 = vmatmul.mubr.f32.gmra.mrb[0].mxu0 %v94
    %v225 = vpop.f32.mrb[0].mxu0
    %v226 = vadd.f32 %v69, %v225
    %v227 = vpop.f32.mrb[0].mxu0
    %228 = vmatprep.mubr.f32.mxu0 0.0
    %229 = vmatmul.mubr.f32.gmra.mrb[0].mxu0 %v97
    %v230 = vpop.f32.mrb[0].mxu0
    %v231 = vadd.f32 %v69, %v230
    %v232 = vpop.f32.mrb[0].mxu0
    %233 = vmatprep.mubr.f32.mxu0 0.0
    %234 = vmatmul.mubr.f32.gmra.mrb[0].mxu0 %v100
    %v235 = vpop.f32.mrb[0].mxu0
    %v236 = vadd.f32 %v69, %v235
    %v237 = vpop.f32.mrb[0].mxu0
    %238 = vmatprep.mubr.f32.mxu0 0.0
    %239 = vmatmul.mubr.f32.gmra.mrb[0].mxu0 %v103
    %v240 = vpop.f32.mrb[0].mxu0
    %v241 = vadd.f32 %v69, %v240
    %v242 = vpop.f32.mrb[0].mxu0
    %243 = vmatprep.mubr.f32.mxu0 0.0
    %244 = vmatmul.mubr.f32.gmra.mrb[0].mxu0 %v106
    %v245 = vpop.f32.mrb[0].mxu0
    %v246 = vadd.f32 %v69, %v245
    %v247 = vpop.f32.mrb[0].mxu0
    %248 = vmatprep.mubr.f32.mxu0 0.0
    %249 = vmatmul.mubr.f32.gmra.mrb[0].mxu0 %v109
    %v250 = vpop.f32.mrb[0].mxu0
    %v251 = vadd.f32 %v69, %v250
    %v252 = vpop.f32.mrb[0].mxu0
    %253 = vmatprep.mubr.f32.mxu0 0.0
    %254 = vmatmul.mubr.f32.gmra.mrb[0].mxu0 %v112
    %v255 = vpop.f32.mrb[0].mxu0
    %v256 = vadd.f32 %v69, %v255
    %v257 = vpop.f32.mrb[0].mxu0
    %258 = vmatprep.mubr.f32.mxu0 0.0
    %259 = vmatmul.mubr.f32.gmra.mrb[0].mxu0 %v115
    %v260 = vpop.f32.mrb[0].mxu0
    %v261 = vadd.f32 %v69, %v260
    %v262 = vpop.f32.mrb[0].mxu0
    %263 = vmatprep.mubr.f32.mxu0 0.0
    %264 = vmatmul.mubr.f32.gmra.mrb[0].mxu0 %v118
    %v265 = vpop.f32.mrb[0].mxu0
    %v266 = vadd.f32 %v69, %v265
    %v267 = vpop.f32.mrb[0].mxu0
    %268 = vdwg.mxu0
    %v269 = vmax.f32 %v191, 0.0
    %v270 = vmax.f32 %v196, 0.0
    %v271 = vmax.f32 %v201, 0.0
    %v272 = vmax.f32 %v206, 0.0
    %v273 = vmax.f32 %v211, 0.0
    %v274 = vmax.f32 %v216, 0.0
    %v275 = vmax.f32 %v221, 0.0
    %v276 = vmax.f32 %v226, 0.0
    %v277 = vmax.f32 %v231, 0.0
    %v278 = vmax.f32 %v236, 0.0
    %v279 = vmax.f32 %v241, 0.0
    %v280 = vmax.f32 %v246, 0.0
    %v281 = vmax.f32 %v251, 0.0
    %v282 = vmax.f32 %v256, 0.0
    %v283 = vmax.f32 %v261, 0.0
    %v284 = vmax.f32 %v266, 0.0
    %v285 = vmul.f32 %v269, %v269
    %v286 = vmul.f32 %v270, %v270
    %v287 = vmul.f32 %v271, %v271
    %v288 = vmul.f32 %v272, %v272
    %v289 = vmul.f32 %v273, %v273
    %v290 = vmul.f32 %v274, %v274
    %v291 = vmul.f32 %v275, %v275
    %v292 = vmul.f32 %v276, %v276
    %v293 = vmul.f32 %v277, %v277
    %v294 = vmul.f32 %v278, %v278
    %v295 = vmul.f32 %v279, %v279
    %v296 = vmul.f32 %v280, %v280
    %v297 = vmul.f32 %v281, %v281
    %v298 = vmul.f32 %v282, %v282
    %v299 = vmul.f32 %v283, %v283
    %v300 = vmul.f32 %v284, %v284
    %v301 = vmul.f32 %v285, 0.2
    %v302 = vmul.f32 %v286, 0.2
    %v303 = vmul.f32 %v287, 0.2
    %v304 = vmul.f32 %v288, 0.2
    %v305 = vmul.f32 %v289, 0.2
    %v306 = vmul.f32 %v290, 0.2
    %v307 = vmul.f32 %v291, 0.2
    %v308 = vmul.f32 %v292, 0.2
    %v309 = vmul.f32 %v293, 0.2
    %v310 = vmul.f32 %v294, 0.2
    %v311 = vmul.f32 %v295, 0.2
    %v312 = vmul.f32 %v296, 0.2
    %v313 = vmul.f32 %v297, 0.2
    %v314 = vmul.f32 %v298, 0.2
    %v315 = vmul.f32 %v299, 0.2
    %v316 = vmul.f32 %v300, 0.2
    %v317 = vmul.f32 %v301, %v269
    %v318 = vmul.f32 %v302, %v270
    %v319 = vmul.f32 %v303, %v271
    %v320 = vmul.f32 %v304, %v272
    %v321 = vmul.f32 %v305, %v273
    %v322 = vmul.f32 %v306, %v274
    %v323 = vmul.f32 %v307, %v275
    %v324 = vmul.f32 %v308, %v276
    %v325 = vmul.f32 %v309, %v277
    %v326 = vmul.f32 %v310, %v278
    %v327 = vmul.f32 %v311, %v279
    %v328 = vmul.f32 %v312, %v280
    %v329 = vmul.f32 %v313, %v281
    %v330 = vmul.f32 %v314, %v282
    %v331 = vmul.f32 %v315, %v283
    %v332 = vmul.f32 %v316, %v284
    %v333 = vmul.f32 %v285, %v285
    %v334 = vmul.f32 %v286, %v286
    %v335 = vmul.f32 %v287, %v287
    %v336 = vmul.f32 %v288, %v288
    %v337 = vmul.f32 %v289, %v289
    %v338 = vmul.f32 %v290, %v290
    %v339 = vmul.f32 %v291, %v291
    %v340 = vmul.f32 %v292, %v292
    %v341 = vmul.f32 %v293, %v293
    %v342 = vmul.f32 %v294, %v294
    %v343 = vmul.f32 %v295, %v295
    %v344 = vmul.f32 %v296, %v296
    %v345 = vmul.f32 %v297, %v297
    %v346 = vmul.f32 %v298, %v298
    %v347 = vmul.f32 %v299, %v299
    %v348 = vmul.f32 %v300, %v300
    %v349 = vsub.f32 %v317, %v333
    %v350 = vsub.f32 %v318, %v334
    %v351 = vsub.f32 %v319, %v335
    %v352 = vsub.f32 %v320, %v336
    %v353 = vsub.f32 %v321, %v337
    %v354 = vsub.f32 %v322, %v338
    %v355 = vsub.f32 %v323, %v339
    %v356 = vsub.f32 %v324, %v340
    %v357 = vsub.f32 %v325, %v341
    %v358 = vsub.f32 %v326, %v342
    %v359 = vsub.f32 %v327, %v343
    %v360 = vsub.f32 %v328, %v344
    %v361 = vsub.f32 %v329, %v345
    %v362 = vsub.f32 %v330, %v346
    %v363 = vsub.f32 %v331, %v347
    %v364 = vsub.f32 %v332, %v348
    %v365 = vmul.f32 %v349, 500.0
    %v366 = vmul.f32 %v350, 500.0
    %v367 = vmul.f32 %v351, 500.0
    %v368 = vmul.f32 %v352, 500.0
    %v369 = vmul.f32 %v353, 500.0
    %v370 = vmul.f32 %v354, 500.0
    %v371 = vmul.f32 %v355, 500.0
    %v372 = vmul.f32 %v356, 500.0
    %v373 = vmul.f32 %v357, 500.0
    %v374 = vmul.f32 %v358, 500.0
    %v375 = vmul.f32 %v359, 500.0
    %v376 = vmul.f32 %v360, 500.0
    %v377 = vmul.f32 %v361, 500.0
    %v378 = vmul.f32 %v362, 500.0
    %v379 = vmul.f32 %v363, 500.0
    %v380 = vmul.f32 %v364, 500.0
    %v381 = vsub.f32 %v191, 0.05
    %v382 = vsub.f32 %v196, 0.05
    %v383 = vsub.f32 %v201, 0.05
    %v384 = vsub.f32 %v206, 0.05
    %v385 = vsub.f32 %v211, 0.05
    %v386 = vsub.f32 %v216, 0.05
    %v387 = vsub.f32 %v221, 0.05
    %v388 = vsub.f32 %v226, 0.05
    %v389 = vsub.f32 %v231, 0.05
    %v390 = vsub.f32 %v236, 0.05
    %v391 = vsub.f32 %v241, 0.05
    %v392 = vsub.f32 %v246, 0.05
    %v393 = vsub.f32 %v251, 0.05
    %v394 = vsub.f32 %v256, 0.05
    %v395 = vsub.f32 %v261, 0.05
    %v396 = vsub.f32 %v266, 0.05
    %vm397 = vcmp.lt.f32.partialorder %v269, 0.1
    %vm398 = vcmp.lt.f32.partialorder %v270, 0.1
    %vm399 = vcmp.lt.f32.partialorder %v271, 0.1
    %vm400 = vcmp.lt.f32.partialorder %v272, 0.1
    %vm401 = vcmp.lt.f32.partialorder %v273, 0.1
    %vm402 = vcmp.lt.f32.partialorder %v274, 0.1
    %vm403 = vcmp.lt.f32.partialorder %v275, 0.1
    %vm404 = vcmp.lt.f32.partialorder %v276, 0.1
    %vm405 = vcmp.lt.f32.partialorder %v277, 0.1
    %vm406 = vcmp.lt.f32.partialorder %v278, 0.1
    %vm407 = vcmp.lt.f32.partialorder %v279, 0.1
    %vm408 = vcmp.lt.f32.partialorder %v280, 0.1
    %vm409 = vcmp.lt.f32.partialorder %v281, 0.1
    %vm410 = vcmp.lt.f32.partialorder %v282, 0.1
    %vm411 = vcmp.lt.f32.partialorder %v283, 0.1
    %vm412 = vcmp.lt.f32.partialorder %v284, 0.1
    %v413 = vsel %vm397, %v365, %v381
    %v414 = vsel %vm398, %v366, %v382
    %v415 = vsel %vm399, %v367, %v383
    %v416 = vsel %vm400, %v368, %v384
    %v417 = vsel %vm401, %v369, %v385
    %v418 = vsel %vm402, %v370, %v386
    %v419 = vsel %vm403, %v371, %v387
    %v420 = vsel %vm404, %v372, %v388
    %v421 = vsel %vm405, %v373, %v389
    %v422 = vsel %vm406, %v374, %v390
    %v423 = vsel %vm407, %v375, %v391
    %v424 = vsel %vm408, %v376, %v392
    %v425 = vsel %vm409, %v377, %v393
    %v426 = vsel %vm410, %v378, %v394
    %v427 = vsel %vm411, %v379, %v395
    %v428 = vsel %vm412, %v380, %v396
    %v429 = vld [vmem:[%s4] sm:$0x7]
    %v430 = vld [vmem:[%s5] sm:$0x1]
    %v431 = vld [vmem:[%s6] sm:$0xff]
    %v432 = vld [vmem:[%s6 + $0x8] sm:$0xff]
    %v433 = vld [vmem:[%s6 + $0x10] sm:$0xff]
    %v434 = vld [vmem:[%s6 + $0x18] sm:$0xff]
    %v435 = vld [vmem:[%s6 + $0x20] sm:$0xff]
    %v436 = vld [vmem:[%s6 + $0x28] sm:$0xff]
    %v437 = vld [vmem:[%s6 + $0x30] sm:$0xff]
    %v438 = vld [vmem:[%s6 + $0x38] sm:$0xff]
    %v440 = vlaneseq
    %v441 = vshrl.u32 %v440, 7
    %v442 = vsub.s32 0, %v441
    %v443 = vrot.slane %v430, %v442
    %v446 = vsel %vm120, %v429, 0
    %448 = vmatprep.subr.mxu0 0.0
    %449 = vmatpush1.msra.mxu0 %v446
    %450 = vmatprep.subr.mxu0 0.0
    %451 = vmatpush1.msra.mxu0 0.0
    %452 = vmatprep.subr.mxu0 0.0
    %453 = vmatpush1.msra.mxu0 0.0
    %454 = vmatprep.subr.mxu0 0.0
    %455 = vmatpush1.msra.mxu0 0.0
    %456 = vmatprep.subr.mxu0 0.0
    %457 = vmatpush1.msra.mxu0 0.0
    %458 = vmatprep.subr.mxu0 0.0
    %459 = vmatpush1.msra.mxu0 0.0
    %460 = vmatprep.subr.mxu0 0.0
    %461 = vmatpush1.msra.mxu0 0.0
    %462 = vmatprep.subr.mxu0 0.0
    %463 = vmatpush1.msra.mxu0 0.0
    %464 = vmatprep.subr.mxu0 0.0
    %465 = vmatpush1.msra.mxu0 0.0
    %466 = vmatprep.subr.mxu0 0.0
    %467 = vmatpush1.msra.mxu0 0.0
    %468 = vmatprep.subr.mxu0 0.0
    %469 = vmatpush1.msra.mxu0 0.0
    %470 = vmatprep.subr.mxu0 0.0
    %471 = vmatpush1.msra.mxu0 0.0
    %472 = vmatprep.subr.mxu0 0.0
    %473 = vmatpush1.msra.mxu0 0.0
    %474 = vmatprep.subr.mxu0 0.0
    %475 = vmatpush1.msra.mxu0 0.0
    %476 = vmatprep.subr.mxu0 0.0
    %477 = vmatpush1.msra.mxu0 0.0
    %478 = vmatprep.subr.mxu0 0.0
    %479 = vmatpush1.msra.mxu0 0.0
    %480 = vmatprep.subr.mxu0 0.0
    %481 = vmatpush1.msra.mxu0 0.0
    %482 = vmatprep.subr.mxu0 0.0
    %483 = vmatpush1.msra.mxu0 0.0
    %484 = vmatprep.subr.mxu0 0.0
    %485 = vmatpush1.msra.mxu0 0.0
    %486 = vmatprep.subr.mxu0 0.0
    %487 = vmatpush1.msra.mxu0 0.0
    %488 = vmatprep.subr.mxu0 0.0
    %489 = vmatpush1.msra.mxu0 0.0
    %490 = vmatprep.subr.mxu0 0.0
    %491 = vmatpush1.msra.mxu0 0.0
    %492 = vmatprep.subr.mxu0 0.0
    %493 = vmatpush1.msra.mxu0 0.0
    %494 = vmatprep.subr.mxu0 0.0
    %495 = vmatpush1.msra.mxu0 0.0
    %496 = vmatprep.subr.mxu0 0.0
    %497 = vmatpush1.msra.mxu0 0.0
    %498 = vmatprep.subr.mxu0 0.0
    %499 = vmatpush1.msra.mxu0 0.0
    %500 = vmatprep.subr.mxu0 0.0
    %501 = vmatpush1.msra.mxu0 0.0
    %502 = vmatprep.subr.mxu0 0.0
    %503 = vmatpush1.msra.mxu0 0.0
    %504 = vmatprep.subr.mxu0 0.0
    %505 = vmatpush1.msra.mxu0 0.0
    %506 = vmatprep.subr.mxu0 0.0
    %507 = vmatpush1.msra.mxu0 0.0
    %508 = vmatprep.subr.mxu0 0.0
    %509 = vmatpush1.msra.mxu0 0.0
    %510 = vmatprep.subr.mxu0 0.0
    %511 = vmatpush1.msra.mxu0 0.0
    %512 = vmatprep.mubr.f32.mxu0 0.0
    %513 = vmatmul.mubr.f32.gmra.mrb[0].mxu0 %v73
    %v514 = vpop.f32.mrb[0].mxu0
    %v515 = vadd.f32 %v443, %v514
    %v516 = vpop.f32.mrb[0].mxu0
    %517 = vmatprep.mubr.f32.mxu0 0.0
    %518 = vmatmul.mubr.f32.gmra.mrb[0].mxu0 %v76
    %v519 = vpop.f32.mrb[0].mxu0
    %v520 = vadd.f32 %v443, %v519
    %v521 = vpop.f32.mrb[0].mxu0
    %522 = vmatprep.mubr.f32.mxu0 0.0
    %523 = vmatmul.mubr.f32.gmra.mrb[0].mxu0 %v79
    %v524 = vpop.f32.mrb[0].mxu0
    %v525 = vadd.f32 %v443, %v524
    %v526 = vpop.f32.mrb[0].mxu0
    %527 = vmatprep.mubr.f32.mxu0 0.0
    %528 = vmatmul.mubr.f32.gmra.mrb[0].mxu0 %v82
    %v529 = vpop.f32.mrb[0].mxu0
    %v530 = vadd.f32 %v443, %v529
    %v531 = vpop.f32.mrb[0].mxu0
    %532 = vmatprep.mubr.f32.mxu0 0.0
    %533 = vmatmul.mubr.f32.gmra.mrb[0].mxu0 %v85
    %v534 = vpop.f32.mrb[0].mxu0
    %v535 = vadd.f32 %v443, %v534
    %v536 = vpop.f32.mrb[0].mxu0
    %537 = vmatprep.mubr.f32.mxu0 0.0
    %538 = vmatmul.mubr.f32.gmra.mrb[0].mxu0 %v88
    %v539 = vpop.f32.mrb[0].mxu0
    %v540 = vadd.f32 %v443, %v539
    %v541 = vpop.f32.mrb[0].mxu0
    %542 = vmatprep.mubr.f32.mxu0 0.0
    %543 = vmatmul.mubr.f32.gmra.mrb[0].mxu0 %v91
    %v544 = vpop.f32.mrb[0].mxu0
    %v545 = vadd.f32 %v443, %v544
    %v546 = vpop.f32.mrb[0].mxu0
    %547 = vmatprep.mubr.f32.mxu0 0.0
    %548 = vmatmul.mubr.f32.gmra.mrb[0].mxu0 %v94
    %v549 = vpop.f32.mrb[0].mxu0
    %v550 = vadd.f32 %v443, %v549
    %v551 = vpop.f32.mrb[0].mxu0
    %552 = vmatprep.mubr.f32.mxu0 0.0
    %553 = vmatmul.mubr.f32.gmra.mrb[0].mxu0 %v97
    %v554 = vpop.f32.mrb[0].mxu0
    %v555 = vadd.f32 %v443, %v554
    %v556 = vpop.f32.mrb[0].mxu0
    %557 = vmatprep.mubr.f32.mxu0 0.0
    %558 = vmatmul.mubr.f32.gmra.mrb[0].mxu0 %v100
    %v559 = vpop.f32.mrb[0].mxu0
    %v560 = vadd.f32 %v443, %v559
    %v561 = vpop.f32.mrb[0].mxu0
    %562 = vmatprep.mubr.f32.mxu0 0.0
    %563 = vmatmul.mubr.f32.gmra.mrb[0].mxu0 %v103
    %v564 = vpop.f32.mrb[0].mxu0
    %v565 = vadd.f32 %v443, %v564
    %v566 = vpop.f32.mrb[0].mxu0
    %567 = vmatprep.mubr.f32.mxu0 0.0
    %568 = vmatmul.mubr.f32.gmra.mrb[0].mxu0 %v106
    %v569 = vpop.f32.mrb[0].mxu0
    %v570 = vadd.f32 %v443, %v569
    %v571 = vpop.f32.mrb[0].mxu0
    %572 = vmatprep.mubr.f32.mxu0 0.0
    %573 = vmatmul.mubr.f32.gmra.mrb[0].mxu0 %v109
    %v574 = vpop.f32.mrb[0].mxu0
    %v575 = vadd.f32 %v443, %v574
    %v576 = vpop.f32.mrb[0].mxu0
    %577 = vmatprep.mubr.f32.mxu0 0.0
    %578 = vmatmul.mubr.f32.gmra.mrb[0].mxu0 %v112
    %v579 = vpop.f32.mrb[0].mxu0
    %v580 = vadd.f32 %v443, %v579
    %v581 = vpop.f32.mrb[0].mxu0
    %582 = vmatprep.mubr.f32.mxu0 0.0
    %583 = vmatmul.mubr.f32.gmra.mrb[0].mxu0 %v115
    %v584 = vpop.f32.mrb[0].mxu0
    %v585 = vadd.f32 %v443, %v584
    %v586 = vpop.f32.mrb[0].mxu0
    %587 = vmatprep.mubr.f32.mxu0 0.0
    %588 = vmatmul.mubr.f32.gmra.mrb[0].mxu0 %v118
    %v589 = vpop.f32.mrb[0].mxu0
    %v590 = vadd.f32 %v443, %v589
    %v591 = vpop.f32.mrb[0].mxu0
    %592 = vdwg.mxu0
    %vm593 = vcmask 523264
    %v595 = vsel %vm593, %v413, 0
    %v598 = vsel %vm593, %v414, 0
    %v601 = vsel %vm593, %v415, 0
    %v604 = vsel %vm593, %v416, 0
    %v607 = vsel %vm593, %v417, 0
    %v610 = vsel %vm593, %v418, 0
    %v613 = vsel %vm593, %v419, 0
    %v616 = vsel %vm593, %v420, 0
    %v619 = vsel %vm593, %v421, 0
    %v622 = vsel %vm593, %v422, 0
    %v625 = vsel %vm593, %v423, 0
    %v628 = vsel %vm593, %v424, 0
    %v631 = vsel %vm593, %v425, 0
    %v634 = vsel %vm593, %v426, 0
    %v637 = vsel %vm593, %v427, 0
    %v640 = vsel %vm593, %v428, 0
    %642 = vmatprep.subr.mxu0 0.0
    %643 = vmatpush1.msra.mxu0 %v431
    %644 = vmatprep.subr.mxu0 0.0
    %645 = vmatpush1.msra.mxu0 %v432
    %646 = vmatprep.subr.mxu0 0.0
    %647 = vmatpush1.msra.mxu0 %v433
    %648 = vmatprep.subr.mxu0 0.0
    %649 = vmatpush1.msra.mxu0 %v434
    %650 = vmatprep.subr.mxu0 0.0
    %651 = vmatpush1.msra.mxu0 %v435
    %652 = vmatprep.subr.mxu0 0.0
    %653 = vmatpush1.msra.mxu0 %v436
    %654 = vmatprep.subr.mxu0 0.0
    %655 = vmatpush1.msra.mxu0 %v437
    %656 = vmatprep.subr.mxu0 0.0
    %657 = vmatpush1.msra.mxu0 %v438
    %658 = vmatprep.subr.mxu0 0.0
    %659 = vmatpush1.msra.mxu0 0.0
    %660 = vmatprep.subr.mxu0 0.0
    %661 = vmatpush1.msra.mxu0 0.0
    %662 = vmatprep.subr.mxu0 0.0
    %663 = vmatpush1.msra.mxu0 0.0
    %664 = vmatprep.subr.mxu0 0.0
    %665 = vmatpush1.msra.mxu0 0.0
    %666 = vmatprep.subr.mxu0 0.0
    %667 = vmatpush1.msra.mxu0 0.0
    %668 = vmatprep.subr.mxu0 0.0
    %669 = vmatpush1.msra.mxu0 0.0
    %670 = vmatprep.subr.mxu0 0.0
    %671 = vmatpush1.msra.mxu0 0.0
    %672 = vmatprep.subr.mxu0 0.0
    %673 = vmatpush1.msra.mxu0 0.0
    %674 = vmatprep.subr.mxu0 0.0
    %675 = vmatpush1.msra.mxu0 0.0
    %676 = vmatprep.subr.mxu0 0.0
    %677 = vmatpush1.msra.mxu0 0.0
    %678 = vmatprep.subr.mxu0 0.0
    %679 = vmatpush1.msra.mxu0 0.0
    %680 = vmatprep.subr.mxu0 0.0
    %681 = vmatpush1.msra.mxu0 0.0
    %682 = vmatprep.subr.mxu0 0.0
    %683 = vmatpush1.msra.mxu0 0.0
    %684 = vmatprep.subr.mxu0 0.0
    %685 = vmatpush1.msra.mxu0 0.0
    %686 = vmatprep.subr.mxu0 0.0
    %687 = vmatpush1.msra.mxu0 0.0
    %688 = vmatprep.subr.mxu0 0.0
    %689 = vmatpush1.msra.mxu0 0.0
    %690 = vmatprep.subr.mxu0 0.0
    %691 = vmatpush1.msra.mxu0 0.0
    %692 = vmatprep.subr.mxu0 0.0
    %693 = vmatpush1.msra.mxu0 0.0
    %694 = vmatprep.subr.mxu0 0.0
    %695 = vmatpush1.msra.mxu0 0.0
    %696 = vmatprep.subr.mxu0 0.0
    %697 = vmatpush1.msra.mxu0 0.0
    %698 = vmatprep.subr.mxu0 0.0
    %699 = vmatpush1.msra.mxu0 0.0
    %700 = vmatprep.subr.mxu0 0.0
    %701 = vmatpush1.msra.mxu0 0.0
    %702 = vmatprep.subr.mxu0 0.0
    %703 = vmatpush1.msra.mxu0 0.0
    %704 = vmatprep.subr.mxu0 0.0
    %705 = vmatpush1.msra.mxu0 0.0
    %706 = vmatprep.mubr.f32.mxu0 0.0
    %707 = vmatmul.mubr.f32.gmra.mrb[0].mxu0 %v595
    %v708 = vpop.f32.mrb[0].mxu0
    %v709 = vadd.f32 0.0, %v708
    %v710 = vpop.f32.mrb[0].mxu0
    %711 = vmatprep.mubr.f32.mxu0 0.0
    %712 = vmatmul.mubr.f32.gmra.mrb[0].mxu0 %v598
    %v713 = vpop.f32.mrb[0].mxu0
    %v714 = vadd.f32 0.0, %v713
    %v715 = vpop.f32.mrb[0].mxu0
    %716 = vmatprep.mubr.f32.mxu0 0.0
    %717 = vmatmul.mubr.f32.gmra.mrb[0].mxu0 %v601
    %v718 = vpop.f32.mrb[0].mxu0
    %v719 = vadd.f32 0.0, %v718
    %v720 = vpop.f32.mrb[0].mxu0
    %721 = vmatprep.mubr.f32.mxu0 0.0
    %722 = vmatmul.mubr.f32.gmra.mrb[0].mxu0 %v604
    %v723 = vpop.f32.mrb[0].mxu0
    %v724 = vadd.f32 0.0, %v723
    %v725 = vpop.f32.mrb[0].mxu0
    %726 = vmatprep.mubr.f32.mxu0 0.0
    %727 = vmatmul.mubr.f32.gmra.mrb[0].mxu0 %v607
    %v728 = vpop.f32.mrb[0].mxu0
    %v729 = vadd.f32 0.0, %v728
    %v730 = vpop.f32.mrb[0].mxu0
    %731 = vmatprep.mubr.f32.mxu0 0.0
    %732 = vmatmul.mubr.f32.gmra.mrb[0].mxu0 %v610
    %v733 = vpop.f32.mrb[0].mxu0
    %v734 = vadd.f32 0.0, %v733
    %v735 = vpop.f32.mrb[0].mxu0
    %736 = vmatprep.mubr.f32.mxu0 0.0
    %737 = vmatmul.mubr.f32.gmra.mrb[0].mxu0 %v613
    %v738 = vpop.f32.mrb[0].mxu0
    %v739 = vadd.f32 0.0, %v738
    %v740 = vpop.f32.mrb[0].mxu0
    %741 = vmatprep.mubr.f32.mxu0 0.0
    %742 = vmatmul.mubr.f32.gmra.mrb[0].mxu0 %v616
    %v743 = vpop.f32.mrb[0].mxu0
    %v744 = vadd.f32 0.0, %v743
    %v745 = vpop.f32.mrb[0].mxu0
    %746 = vmatprep.mubr.f32.mxu0 0.0
    %747 = vmatmul.mubr.f32.gmra.mrb[0].mxu0 %v619
    %v748 = vpop.f32.mrb[0].mxu0
    %v749 = vadd.f32 0.0, %v748
    %v750 = vpop.f32.mrb[0].mxu0
    %751 = vmatprep.mubr.f32.mxu0 0.0
    %752 = vmatmul.mubr.f32.gmra.mrb[0].mxu0 %v622
    %v753 = vpop.f32.mrb[0].mxu0
    %v754 = vadd.f32 0.0, %v753
    %v755 = vpop.f32.mrb[0].mxu0
    %756 = vmatprep.mubr.f32.mxu0 0.0
    %757 = vmatmul.mubr.f32.gmra.mrb[0].mxu0 %v625
    %v758 = vpop.f32.mrb[0].mxu0
    %v759 = vadd.f32 0.0, %v758
    %v760 = vpop.f32.mrb[0].mxu0
    %761 = vmatprep.mubr.f32.mxu0 0.0
    %762 = vmatmul.mubr.f32.gmra.mrb[0].mxu0 %v628
    %v763 = vpop.f32.mrb[0].mxu0
    %v764 = vadd.f32 0.0, %v763
    %v765 = vpop.f32.mrb[0].mxu0
    %766 = vmatprep.mubr.f32.mxu0 0.0
    %767 = vmatmul.mubr.f32.gmra.mrb[0].mxu0 %v631
    %v768 = vpop.f32.mrb[0].mxu0
    %v769 = vadd.f32 0.0, %v768
    %v770 = vpop.f32.mrb[0].mxu0
    %771 = vmatprep.mubr.f32.mxu0 0.0
    %772 = vmatmul.mubr.f32.gmra.mrb[0].mxu0 %v634
    %v773 = vpop.f32.mrb[0].mxu0
    %v774 = vadd.f32 0.0, %v773
    %v775 = vpop.f32.mrb[0].mxu0
    %776 = vmatprep.mubr.f32.mxu0 0.0
    %777 = vmatmul.mubr.f32.gmra.mrb[0].mxu0 %v637
    %v778 = vpop.f32.mrb[0].mxu0
    %v779 = vadd.f32 0.0, %v778
    %v780 = vpop.f32.mrb[0].mxu0
    %781 = vmatprep.mubr.f32.mxu0 0.0
    %782 = vmatmul.mubr.f32.gmra.mrb[0].mxu0 %v640
    %v783 = vpop.f32.mrb[0].mxu0
    %v784 = vadd.f32 0.0, %v783
    %v785 = vpop.f32.mrb[0].mxu0
    %786 = vdwg.mxu0
    %v787 = vadd.f32 %v515, %v709
    %v788 = vadd.f32 %v520, %v714
    %v789 = vadd.f32 %v525, %v719
    %v790 = vadd.f32 %v530, %v724
    %v791 = vadd.f32 %v535, %v729
    %v792 = vadd.f32 %v540, %v734
    %v793 = vadd.f32 %v545, %v739
    %v794 = vadd.f32 %v550, %v744
    %v795 = vadd.f32 %v555, %v749
    %v796 = vadd.f32 %v560, %v754
    %v797 = vadd.f32 %v565, %v759
    %v798 = vadd.f32 %v570, %v764
    %v799 = vadd.f32 %v575, %v769
    %v800 = vadd.f32 %v580, %v774
    %v801 = vadd.f32 %v585, %v779
    %v802 = vadd.f32 %v590, %v784
    %v803 = vmax.f32 %v787, 0.0
    %v804 = vmax.f32 %v788, 0.0
    %v805 = vmax.f32 %v789, 0.0
    %v806 = vmax.f32 %v790, 0.0
    %v807 = vmax.f32 %v791, 0.0
    %v808 = vmax.f32 %v792, 0.0
    %v809 = vmax.f32 %v793, 0.0
    %v810 = vmax.f32 %v794, 0.0
    %v811 = vmax.f32 %v795, 0.0
    %v812 = vmax.f32 %v796, 0.0
    %v813 = vmax.f32 %v797, 0.0
    %v814 = vmax.f32 %v798, 0.0
    %v815 = vmax.f32 %v799, 0.0
    %v816 = vmax.f32 %v800, 0.0
    %v817 = vmax.f32 %v801, 0.0
    %v818 = vmax.f32 %v802, 0.0
    %v819 = vmul.f32 %v803, %v803
    %v820 = vmul.f32 %v804, %v804
    %v821 = vmul.f32 %v805, %v805
    %v822 = vmul.f32 %v806, %v806
    %v823 = vmul.f32 %v807, %v807
    %v824 = vmul.f32 %v808, %v808
    %v825 = vmul.f32 %v809, %v809
    %v826 = vmul.f32 %v810, %v810
    %v827 = vmul.f32 %v811, %v811
    %v828 = vmul.f32 %v812, %v812
    %v829 = vmul.f32 %v813, %v813
    %v830 = vmul.f32 %v814, %v814
    %v831 = vmul.f32 %v815, %v815
    %v832 = vmul.f32 %v816, %v816
    %v833 = vmul.f32 %v817, %v817
    %v834 = vmul.f32 %v818, %v818
    %v835 = vmul.f32 %v819, 0.2
    %v836 = vmul.f32 %v820, 0.2
    %v837 = vmul.f32 %v821, 0.2
    %v838 = vmul.f32 %v822, 0.2
    %v839 = vmul.f32 %v823, 0.2
    %v840 = vmul.f32 %v824, 0.2
    %v841 = vmul.f32 %v825, 0.2
    %v842 = vmul.f32 %v826, 0.2
    %v843 = vmul.f32 %v827, 0.2
    %v844 = vmul.f32 %v828, 0.2
    %v845 = vmul.f32 %v829, 0.2
    %v846 = vmul.f32 %v830, 0.2
    %v847 = vmul.f32 %v831, 0.2
    %v848 = vmul.f32 %v832, 0.2
    %v849 = vmul.f32 %v833, 0.2
    %v850 = vmul.f32 %v834, 0.2
    %v851 = vmul.f32 %v835, %v803
    %v852 = vmul.f32 %v836, %v804
    %v853 = vmul.f32 %v837, %v805
    %v854 = vmul.f32 %v838, %v806
    %v855 = vmul.f32 %v839, %v807
    %v856 = vmul.f32 %v840, %v808
    %v857 = vmul.f32 %v841, %v809
    %v858 = vmul.f32 %v842, %v810
    %v859 = vmul.f32 %v843, %v811
    %v860 = vmul.f32 %v844, %v812
    %v861 = vmul.f32 %v845, %v813
    %v862 = vmul.f32 %v846, %v814
    %v863 = vmul.f32 %v847, %v815
    %v864 = vmul.f32 %v848, %v816
    %v865 = vmul.f32 %v849, %v817
    %v866 = vmul.f32 %v850, %v818
    %v867 = vmul.f32 %v819, %v819
    %v868 = vmul.f32 %v820, %v820
    %v869 = vmul.f32 %v821, %v821
    %v870 = vmul.f32 %v822, %v822
    %v871 = vmul.f32 %v823, %v823
    %v872 = vmul.f32 %v824, %v824
    %v873 = vmul.f32 %v825, %v825
    %v874 = vmul.f32 %v826, %v826
    %v875 = vmul.f32 %v827, %v827
    %v876 = vmul.f32 %v828, %v828
    %v877 = vmul.f32 %v829, %v829
    %v878 = vmul.f32 %v830, %v830
    %v879 = vmul.f32 %v831, %v831
    %v880 = vmul.f32 %v832, %v832
    %v881 = vmul.f32 %v833, %v833
    %v882 = vmul.f32 %v834, %v834
    %v883 = vsub.f32 %v851, %v867
    %v884 = vsub.f32 %v852, %v868
    %v885 = vsub.f32 %v853, %v869
    %v886 = vsub.f32 %v854, %v870
    %v887 = vsub.f32 %v855, %v871
    %v888 = vsub.f32 %v856, %v872
    %v889 = vsub.f32 %v857, %v873
    %v890 = vsub.f32 %v858, %v874
    %v891 = vsub.f32 %v859, %v875
    %v892 = vsub.f32 %v860, %v876
    %v893 = vsub.f32 %v861, %v877
    %v894 = vsub.f32 %v862, %v878
    %v895 = vsub.f32 %v863, %v879
    %v896 = vsub.f32 %v864, %v880
    %v897 = vsub.f32 %v865, %v881
    %v898 = vsub.f32 %v866, %v882
    %v899 = vmul.f32 %v883, 500.0
    %v900 = vmul.f32 %v884, 500.0
    %v901 = vmul.f32 %v885, 500.0
    %v902 = vmul.f32 %v886, 500.0
    %v903 = vmul.f32 %v887, 500.0
    %v904 = vmul.f32 %v888, 500.0
    %v905 = vmul.f32 %v889, 500.0
    %v906 = vmul.f32 %v890, 500.0
    %v907 = vmul.f32 %v891, 500.0
    %v908 = vmul.f32 %v892, 500.0
    %v909 = vmul.f32 %v893, 500.0
    %v910 = vmul.f32 %v894, 500.0
    %v911 = vmul.f32 %v895, 500.0
    %v912 = vmul.f32 %v896, 500.0
    %v913 = vmul.f32 %v897, 500.0
    %v914 = vmul.f32 %v898, 500.0
    %v915 = vsub.f32 %v787, 0.05
    %v916 = vsub.f32 %v788, 0.05
    %v917 = vsub.f32 %v789, 0.05
    %v918 = vsub.f32 %v790, 0.05
    %v919 = vsub.f32 %v791, 0.05
    %v920 = vsub.f32 %v792, 0.05
    %v921 = vsub.f32 %v793, 0.05
    %v922 = vsub.f32 %v794, 0.05
    %v923 = vsub.f32 %v795, 0.05
    %v924 = vsub.f32 %v796, 0.05
    %v925 = vsub.f32 %v797, 0.05
    %v926 = vsub.f32 %v798, 0.05
    %v927 = vsub.f32 %v799, 0.05
    %v928 = vsub.f32 %v800, 0.05
    %v929 = vsub.f32 %v801, 0.05
    %v930 = vsub.f32 %v802, 0.05
    %vm931 = vcmp.lt.f32.partialorder %v803, 0.1
    %vm932 = vcmp.lt.f32.partialorder %v804, 0.1
    %vm933 = vcmp.lt.f32.partialorder %v805, 0.1
    %vm934 = vcmp.lt.f32.partialorder %v806, 0.1
    %vm935 = vcmp.lt.f32.partialorder %v807, 0.1
    %vm936 = vcmp.lt.f32.partialorder %v808, 0.1
    %vm937 = vcmp.lt.f32.partialorder %v809, 0.1
    %vm938 = vcmp.lt.f32.partialorder %v810, 0.1
    %vm939 = vcmp.lt.f32.partialorder %v811, 0.1
    %vm940 = vcmp.lt.f32.partialorder %v812, 0.1
    %vm941 = vcmp.lt.f32.partialorder %v813, 0.1
    %vm942 = vcmp.lt.f32.partialorder %v814, 0.1
    %vm943 = vcmp.lt.f32.partialorder %v815, 0.1
    %vm944 = vcmp.lt.f32.partialorder %v816, 0.1
    %vm945 = vcmp.lt.f32.partialorder %v817, 0.1
    %vm946 = vcmp.lt.f32.partialorder %v818, 0.1
    %v947 = vsel %vm931, %v899, %v915
    %v948 = vsel %vm932, %v900, %v916
    %v949 = vsel %vm933, %v901, %v917
    %v950 = vsel %vm934, %v902, %v918
    %v951 = vsel %vm935, %v903, %v919
    %v952 = vsel %vm936, %v904, %v920
    %v953 = vsel %vm937, %v905, %v921
    %v954 = vsel %vm938, %v906, %v922
    %v955 = vsel %vm939, %v907, %v923
    %v956 = vsel %vm940, %v908, %v924
    %v957 = vsel %vm941, %v909, %v925
    %v958 = vsel %vm942, %v910, %v926
    %v959 = vsel %vm943, %v911, %v927
    %v960 = vsel %vm944, %v912, %v928
    %v961 = vsel %vm945, %v913, %v929
    %v962 = vsel %vm946, %v914, %v930
    %v963 = vld [vmem:[%s7] sm:$0x7]
    %v964 = vld [vmem:[%s8] sm:$0x1]
    %v966 = vlaneseq
    %v967 = vshrl.u32 %v966, 7
    %v968 = vsub.s32 0, %v967
    %v969 = vrot.slane %v964, %v968
    %v972 = vsel %vm120, %v963, 0
    %974 = vmatprep.subr.mxu0 0.0
    %975 = vmatpush1.msra.mxu0 %v972
    %976 = vmatprep.subr.mxu0 0.0
    %977 = vmatpush1.msra.mxu0 0.0
    %978 = vmatprep.subr.mxu0 0.0
    %979 = vmatpush1.msra.mxu0 0.0
    %980 = vmatprep.subr.mxu0 0.0
    %981 = vmatpush1.msra.mxu0 0.0
    %982 = vmatprep.subr.mxu0 0.0
    %983 = vmatpush1.msra.mxu0 0.0
    %984 = vmatprep.subr.mxu0 0.0
    %985 = vmatpush1.msra.mxu0 0.0
    %986 = vmatprep.subr.mxu0 0.0
    %987 = vmatpush1.msra.mxu0 0.0
    %988 = vmatprep.subr.mxu0 0.0
    %989 = vmatpush1.msra.mxu0 0.0
    %990 = vmatprep.subr.mxu0 0.0
    %991 = vmatpush1.msra.mxu0 0.0
    %992 = vmatprep.subr.mxu0 0.0
    %993 = vmatpush1.msra.mxu0 0.0
    %994 = vmatprep.subr.mxu0 0.0
    %995 = vmatpush1.msra.mxu0 0.0
    %996 = vmatprep.subr.mxu0 0.0
    %997 = vmatpush1.msra.mxu0 0.0
    %998 = vmatprep.subr.mxu0 0.0
    %999 = vmatpush1.msra.mxu0 0.0
    %1000 = vmatprep.subr.mxu0 0.0
    %1001 = vmatpush1.msra.mxu0 0.0
    %1002 = vmatprep.subr.mxu0 0.0
    %1003 = vmatpush1.msra.mxu0 0.0
    %1004 = vmatprep.subr.mxu0 0.0
    %1005 = vmatpush1.msra.mxu0 0.0
    %1006 = vmatprep.subr.mxu0 0.0
    %1007 = vmatpush1.msra.mxu0 0.0
    %1008 = vmatprep.subr.mxu0 0.0
    %1009 = vmatpush1.msra.mxu0 0.0
    %1010 = vmatprep.subr.mxu0 0.0
    %1011 = vmatpush1.msra.mxu0 0.0
    %1012 = vmatprep.subr.mxu0 0.0
    %1013 = vmatpush1.msra.mxu0 0.0
    %1014 = vmatprep.subr.mxu0 0.0
    %1015 = vmatpush1.msra.mxu0 0.0
    %1016 = vmatprep.subr.mxu0 0.0
    %1017 = vmatpush1.msra.mxu0 0.0
    %1018 = vmatprep.subr.mxu0 0.0
    %1019 = vmatpush1.msra.mxu0 0.0
    %1020 = vmatprep.subr.mxu0 0.0
    %1021 = vmatpush1.msra.mxu0 0.0
    %1022 = vmatprep.subr.mxu0 0.0
    %1023 = vmatpush1.msra.mxu0 0.0
    %1024 = vmatprep.subr.mxu0 0.0
    %1025 = vmatpush1.msra.mxu0 0.0
    %1026 = vmatprep.subr.mxu0 0.0
    %1027 = vmatpush1.msra.mxu0 0.0
    %1028 = vmatprep.subr.mxu0 0.0
    %1029 = vmatpush1.msra.mxu0 0.0
    %1030 = vmatprep.subr.mxu0 0.0
    %1031 = vmatpush1.msra.mxu0 0.0
    %1032 = vmatprep.subr.mxu0 0.0
    %1033 = vmatpush1.msra.mxu0 0.0
    %1034 = vmatprep.subr.mxu0 0.0
    %1035 = vmatpush1.msra.mxu0 0.0
    %1036 = vmatprep.subr.mxu0 0.0
    %1037 = vmatpush1.msra.mxu0 0.0
    %1038 = vmatprep.mubr.f32.mxu0 0.0
    %1039 = vmatmul.mubr.f32.gmra.mrb[0].mxu0 %v73
    %v1040 = vpop.f32.mrb[0].mxu0
    %v1041 = vadd.f32 %v969, %v1040
    %v1042 = vpop.f32.mrb[0].mxu0
    %1043 = vmatprep.mubr.f32.mxu0 0.0
    %1044 = vmatmul.mubr.f32.gmra.mrb[0].mxu0 %v76
    %v1045 = vpop.f32.mrb[0].mxu0
    %v1046 = vadd.f32 %v969, %v1045
    %v1047 = vpop.f32.mrb[0].mxu0
    %1048 = vmatprep.mubr.f32.mxu0 0.0
    %1049 = vmatmul.mubr.f32.gmra.mrb[0].mxu0 %v79
    %v1050 = vpop.f32.mrb[0].mxu0
    %v1051 = vadd.f32 %v969, %v1050
    %v1052 = vpop.f32.mrb[0].mxu0
    %1053 = vmatprep.mubr.f32.mxu0 0.0
    %1054 = vmatmul.mubr.f32.gmra.mrb[0].mxu0 %v82
    %v1055 = vpop.f32.mrb[0].mxu0
    %v1056 = vadd.f32 %v969, %v1055
    %v1057 = vpop.f32.mrb[0].mxu0
    %1058 = vmatprep.mubr.f32.mxu0 0.0
    %1059 = vmatmul.mubr.f32.gmra.mrb[0].mxu0 %v85
    %v1060 = vpop.f32.mrb[0].mxu0
    %v1061 = vadd.f32 %v969, %v1060
    %v1062 = vpop.f32.mrb[0].mxu0
    %1063 = vmatprep.mubr.f32.mxu0 0.0
    %1064 = vmatmul.mubr.f32.gmra.mrb[0].mxu0 %v88
    %v1065 = vpop.f32.mrb[0].mxu0
    %v1066 = vadd.f32 %v969, %v1065
    %v1067 = vpop.f32.mrb[0].mxu0
    %1068 = vmatprep.mubr.f32.mxu0 0.0
    %1069 = vmatmul.mubr.f32.gmra.mrb[0].mxu0 %v91
    %v1070 = vpop.f32.mrb[0].mxu0
    %v1071 = vadd.f32 %v969, %v1070
    %v1072 = vpop.f32.mrb[0].mxu0
    %1073 = vmatprep.mubr.f32.mxu0 0.0
    %1074 = vmatmul.mubr.f32.gmra.mrb[0].mxu0 %v94
    %v1075 = vpop.f32.mrb[0].mxu0
    %v1076 = vadd.f32 %v969, %v1075
    %v1077 = vpop.f32.mrb[0].mxu0
    %1078 = vmatprep.mubr.f32.mxu0 0.0
    %1079 = vmatmul.mubr.f32.gmra.mrb[0].mxu0 %v97
    %v1080 = vpop.f32.mrb[0].mxu0
    %v1081 = vadd.f32 %v969, %v1080
    %v1082 = vpop.f32.mrb[0].mxu0
    %1083 = vmatprep.mubr.f32.mxu0 0.0
    %1084 = vmatmul.mubr.f32.gmra.mrb[0].mxu0 %v100
    %v1085 = vpop.f32.mrb[0].mxu0
    %v1086 = vadd.f32 %v969, %v1085
    %v1087 = vpop.f32.mrb[0].mxu0
    %1088 = vmatprep.mubr.f32.mxu0 0.0
    %1089 = vmatmul.mubr.f32.gmra.mrb[0].mxu0 %v103
    %v1090 = vpop.f32.mrb[0].mxu0
    %v1091 = vadd.f32 %v969, %v1090
    %v1092 = vpop.f32.mrb[0].mxu0
    %1093 = vmatprep.mubr.f32.mxu0 0.0
    %1094 = vmatmul.mubr.f32.gmra.mrb[0].mxu0 %v106
    %v1095 = vpop.f32.mrb[0].mxu0
    %v1096 = vadd.f32 %v969, %v1095
    %v1097 = vpop.f32.mrb[0].mxu0
    %1098 = vmatprep.mubr.f32.mxu0 0.0
    %1099 = vmatmul.mubr.f32.gmra.mrb[0].mxu0 %v109
    %v1100 = vpop.f32.mrb[0].mxu0
    %v1101 = vadd.f32 %v969, %v1100
    %v1102 = vpop.f32.mrb[0].mxu0
    %1103 = vmatprep.mubr.f32.mxu0 0.0
    %1104 = vmatmul.mubr.f32.gmra.mrb[0].mxu0 %v112
    %v1105 = vpop.f32.mrb[0].mxu0
    %v1106 = vadd.f32 %v969, %v1105
    %v1107 = vpop.f32.mrb[0].mxu0
    %1108 = vmatprep.mubr.f32.mxu0 0.0
    %1109 = vmatmul.mubr.f32.gmra.mrb[0].mxu0 %v115
    %v1110 = vpop.f32.mrb[0].mxu0
    %v1111 = vadd.f32 %v969, %v1110
    %v1112 = vpop.f32.mrb[0].mxu0
    %1113 = vmatprep.mubr.f32.mxu0 0.0
    %1114 = vmatmul.mubr.f32.gmra.mrb[0].mxu0 %v118
    %v1115 = vpop.f32.mrb[0].mxu0
    %v1116 = vadd.f32 %v969, %v1115
    %v1117 = vpop.f32.mrb[0].mxu0
    %1118 = vdwg.mxu0
    %v1119 = vmax.f32 %v1041, 0.0
    %v1120 = vmax.f32 %v1046, 0.0
    %v1121 = vmax.f32 %v1051, 0.0
    %v1122 = vmax.f32 %v1056, 0.0
    %v1123 = vmax.f32 %v1061, 0.0
    %v1124 = vmax.f32 %v1066, 0.0
    %v1125 = vmax.f32 %v1071, 0.0
    %v1126 = vmax.f32 %v1076, 0.0
    %v1127 = vmax.f32 %v1081, 0.0
    %v1128 = vmax.f32 %v1086, 0.0
    %v1129 = vmax.f32 %v1091, 0.0
    %v1130 = vmax.f32 %v1096, 0.0
    %v1131 = vmax.f32 %v1101, 0.0
    %v1132 = vmax.f32 %v1106, 0.0
    %v1133 = vmax.f32 %v1111, 0.0
    %v1134 = vmax.f32 %v1116, 0.0
    %v1135 = vld [vmem:[%s9] sm:$0xff]
    %v1136 = vld [vmem:[%s9 + $0x8] sm:$0xff]
    %v1137 = vld [vmem:[%s9 + $0x10] sm:$0xff]
    %v1138 = vld [vmem:[%s9 + $0x18] sm:$0xff]
    %v1139 = vld [vmem:[%s10] sm:$0x1]
    %v1141 = vlaneseq
    %v1142 = vshrl.u32 %v1141, 7
    %v1143 = vsub.s32 0, %v1142
    %v1144 = vrot.slane %v1139, %v1143
    %vm1146 = vcmask 261120
    %v1148 = vsel %vm1146, %v1119, 0
    %v1151 = vsel %vm1146, %v1120, 0
    %v1154 = vsel %vm1146, %v1121, 0
    %v1157 = vsel %vm1146, %v1122, 0
    %v1160 = vsel %vm1146, %v1123, 0
    %v1163 = vsel %vm1146, %v1124, 0
    %v1166 = vsel %vm1146, %v1125, 0
    %v1169 = vsel %vm1146, %v1126, 0
    %v1172 = vsel %vm1146, %v1127, 0
    %v1175 = vsel %vm1146, %v1128, 0
    %v1178 = vsel %vm1146, %v1129, 0
    %v1181 = vsel %vm1146, %v1130, 0
    %v1184 = vsel %vm1146, %v1131, 0
    %v1187 = vsel %vm1146, %v1132, 0
    %v1190 = vsel %vm1146, %v1133, 0
    %v1193 = vsel %vm1146, %v1134, 0
    %1195 = vmatprep.subr.mxu0 0.0
    %1196 = vmatpush1.msra.mxu0 %v1135
    %1197 = vmatprep.subr.mxu0 0.0
    %1198 = vmatpush1.msra.mxu0 %v1136
    %1199 = vmatprep.subr.mxu0 0.0
    %1200 = vmatpush1.msra.mxu0 %v1137
    %1201 = vmatprep.subr.mxu0 0.0
    %1202 = vmatpush1.msra.mxu0 %v1138
    %1203 = vmatprep.subr.mxu0 0.0
    %1204 = vmatpush1.msra.mxu0 0.0
    %1205 = vmatprep.subr.mxu0 0.0
    %1206 = vmatpush1.msra.mxu0 0.0
    %1207 = vmatprep.subr.mxu0 0.0
    %1208 = vmatpush1.msra.mxu0 0.0
    %1209 = vmatprep.subr.mxu0 0.0
    %1210 = vmatpush1.msra.mxu0 0.0
    %1211 = vmatprep.subr.mxu0 0.0
    %1212 = vmatpush1.msra.mxu0 0.0
    %1213 = vmatprep.subr.mxu0 0.0
    %1214 = vmatpush1.msra.mxu0 0.0
    %1215 = vmatprep.subr.mxu0 0.0
    %1216 = vmatpush1.msra.mxu0 0.0
    %1217 = vmatprep.subr.mxu0 0.0
    %1218 = vmatpush1.msra.mxu0 0.0
    %1219 = vmatprep.subr.mxu0 0.0
    %1220 = vmatpush1.msra.mxu0 0.0
    %1221 = vmatprep.subr.mxu0 0.0
    %1222 = vmatpush1.msra.mxu0 0.0
    %1223 = vmatprep.subr.mxu0 0.0
    %1224 = vmatpush1.msra.mxu0 0.0
    %1225 = vmatprep.subr.mxu0 0.0
    %1226 = vmatpush1.msra.mxu0 0.0
    %1227 = vmatprep.subr.mxu0 0.0
    %1228 = vmatpush1.msra.mxu0 0.0
    %1229 = vmatprep.subr.mxu0 0.0
    %1230 = vmatpush1.msra.mxu0 0.0
    %1231 = vmatprep.subr.mxu0 0.0
    %1232 = vmatpush1.msra.mxu0 0.0
    %1233 = vmatprep.subr.mxu0 0.0
    %1234 = vmatpush1.msra.mxu0 0.0
    %1235 = vmatprep.subr.mxu0 0.0
    %1236 = vmatpush1.msra.mxu0 0.0
    %1237 = vmatprep.subr.mxu0 0.0
    %1238 = vmatpush1.msra.mxu0 0.0
    %1239 = vmatprep.subr.mxu0 0.0
    %1240 = vmatpush1.msra.mxu0 0.0
    %1241 = vmatprep.subr.mxu0 0.0
    %1242 = vmatpush1.msra.mxu0 0.0
    %1243 = vmatprep.subr.mxu0 0.0
    %1244 = vmatpush1.msra.mxu0 0.0
    %1245 = vmatprep.subr.mxu0 0.0
    %1246 = vmatpush1.msra.mxu0 0.0
    %1247 = vmatprep.subr.mxu0 0.0
    %1248 = vmatpush1.msra.mxu0 0.0
    %1249 = vmatprep.subr.mxu0 0.0
    %1250 = vmatpush1.msra.mxu0 0.0
    %1251 = vmatprep.subr.mxu0 0.0
    %1252 = vmatpush1.msra.mxu0 0.0
    %1253 = vmatprep.subr.mxu0 0.0
    %1254 = vmatpush1.msra.mxu0 0.0
    %1255 = vmatprep.subr.mxu0 0.0
    %1256 = vmatpush1.msra.mxu0 0.0
    %1257 = vmatprep.subr.mxu0 0.0
    %1258 = vmatpush1.msra.mxu0 0.0
    %1259 = vmatprep.mubr.f32.mxu0 0.0
    %1260 = vmatmul.mubr.f32.gmra.mrb[0].mxu0 %v1148
    %v1261 = vpop.f32.mrb[0].mxu0
    %v1262 = vadd.f32 %v1144, %v1261
    %v1263 = vpop.f32.mrb[0].mxu0
    %1264 = vmatprep.mubr.f32.mxu0 0.0
    %1265 = vmatmul.mubr.f32.gmra.mrb[0].mxu0 %v1151
    %v1266 = vpop.f32.mrb[0].mxu0
    %v1267 = vadd.f32 %v1144, %v1266
    %v1268 = vpop.f32.mrb[0].mxu0
    %1269 = vmatprep.mubr.f32.mxu0 0.0
    %1270 = vmatmul.mubr.f32.gmra.mrb[0].mxu0 %v1154
    %v1271 = vpop.f32.mrb[0].mxu0
    %v1272 = vadd.f32 %v1144, %v1271
    %v1273 = vpop.f32.mrb[0].mxu0
    %1274 = vmatprep.mubr.f32.mxu0 0.0
    %1275 = vmatmul.mubr.f32.gmra.mrb[0].mxu0 %v1157
    %v1276 = vpop.f32.mrb[0].mxu0
    %v1277 = vadd.f32 %v1144, %v1276
    %v1278 = vpop.f32.mrb[0].mxu0
    %1279 = vmatprep.mubr.f32.mxu0 0.0
    %1280 = vmatmul.mubr.f32.gmra.mrb[0].mxu0 %v1160
    %v1281 = vpop.f32.mrb[0].mxu0
    %v1282 = vadd.f32 %v1144, %v1281
    %v1283 = vpop.f32.mrb[0].mxu0
    %1284 = vmatprep.mubr.f32.mxu0 0.0
    %1285 = vmatmul.mubr.f32.gmra.mrb[0].mxu0 %v1163
    %v1286 = vpop.f32.mrb[0].mxu0
    %v1287 = vadd.f32 %v1144, %v1286
    %v1288 = vpop.f32.mrb[0].mxu0
    %1289 = vmatprep.mubr.f32.mxu0 0.0
    %1290 = vmatmul.mubr.f32.gmra.mrb[0].mxu0 %v1166
    %v1291 = vpop.f32.mrb[0].mxu0
    %v1292 = vadd.f32 %v1144, %v1291
    %v1293 = vpop.f32.mrb[0].mxu0
    %1294 = vmatprep.mubr.f32.mxu0 0.0
    %1295 = vmatmul.mubr.f32.gmra.mrb[0].mxu0 %v1169
    %v1296 = vpop.f32.mrb[0].mxu0
    %v1297 = vadd.f32 %v1144, %v1296
    %v1298 = vpop.f32.mrb[0].mxu0
    %1299 = vmatprep.mubr.f32.mxu0 0.0
    %1300 = vmatmul.mubr.f32.gmra.mrb[0].mxu0 %v1172
    %v1301 = vpop.f32.mrb[0].mxu0
    %v1302 = vadd.f32 %v1144, %v1301
    %v1303 = vpop.f32.mrb[0].mxu0
    %1304 = vmatprep.mubr.f32.mxu0 0.0
    %1305 = vmatmul.mubr.f32.gmra.mrb[0].mxu0 %v1175
    %v1306 = vpop.f32.mrb[0].mxu0
    %v1307 = vadd.f32 %v1144, %v1306
    %v1308 = vpop.f32.mrb[0].mxu0
    %1309 = vmatprep.mubr.f32.mxu0 0.0
    %1310 = vmatmul.mubr.f32.gmra.mrb[0].mxu0 %v1178
    %v1311 = vpop.f32.mrb[0].mxu0
    %v1312 = vadd.f32 %v1144, %v1311
    %v1313 = vpop.f32.mrb[0].mxu0
    %1314 = vmatprep.mubr.f32.mxu0 0.0
    %1315 = vmatmul.mubr.f32.gmra.mrb[0].mxu0 %v1181
    %v1316 = vpop.f32.mrb[0].mxu0
    %v1317 = vadd.f32 %v1144, %v1316
    %v1318 = vpop.f32.mrb[0].mxu0
    %1319 = vmatprep.mubr.f32.mxu0 0.0
    %1320 = vmatmul.mubr.f32.gmra.mrb[0].mxu0 %v1184
    %v1321 = vpop.f32.mrb[0].mxu0
    %v1322 = vadd.f32 %v1144, %v1321
    %v1323 = vpop.f32.mrb[0].mxu0
    %1324 = vmatprep.mubr.f32.mxu0 0.0
    %1325 = vmatmul.mubr.f32.gmra.mrb[0].mxu0 %v1187
    %v1326 = vpop.f32.mrb[0].mxu0
    %v1327 = vadd.f32 %v1144, %v1326
    %v1328 = vpop.f32.mrb[0].mxu0
    %1329 = vmatprep.mubr.f32.mxu0 0.0
    %1330 = vmatmul.mubr.f32.gmra.mrb[0].mxu0 %v1190
    %v1331 = vpop.f32.mrb[0].mxu0
    %v1332 = vadd.f32 %v1144, %v1331
    %v1333 = vpop.f32.mrb[0].mxu0
    %1334 = vmatprep.mubr.f32.mxu0 0.0
    %1335 = vmatmul.mubr.f32.gmra.mrb[0].mxu0 %v1193
    %v1336 = vpop.f32.mrb[0].mxu0
    %v1337 = vadd.f32 %v1144, %v1336
    %v1338 = vpop.f32.mrb[0].mxu0
    %1339 = vdwg.mxu0
    %v1340 = vmax.f32 %v1262, 0.0
    %v1341 = vmax.f32 %v1267, 0.0
    %v1342 = vmax.f32 %v1272, 0.0
    %v1343 = vmax.f32 %v1277, 0.0
    %v1344 = vmax.f32 %v1282, 0.0
    %v1345 = vmax.f32 %v1287, 0.0
    %v1346 = vmax.f32 %v1292, 0.0
    %v1347 = vmax.f32 %v1297, 0.0
    %v1348 = vmax.f32 %v1302, 0.0
    %v1349 = vmax.f32 %v1307, 0.0
    %v1350 = vmax.f32 %v1312, 0.0
    %v1351 = vmax.f32 %v1317, 0.0
    %v1352 = vmax.f32 %v1322, 0.0
    %v1353 = vmax.f32 %v1327, 0.0
    %v1354 = vmax.f32 %v1332, 0.0
    %v1355 = vmax.f32 %v1337, 0.0
    %v1356 = vld [vmem:[%s11] sm:$0xff]
    %v1357 = vld [vmem:[%s11 + $0x8] sm:$0xff]
    %v1358 = vld [vmem:[%s11 + $0x10] sm:$0xff]
    %v1359 = vld [vmem:[%s11 + $0x18] sm:$0xff]
    %v1360 = vld [vmem:[%s12] sm:$0x1]
    %v1362 = vlaneseq
    %v1363 = vshrl.u32 %v1362, 7
    %v1364 = vsub.s32 0, %v1363
    %v1365 = vrot.slane %v1360, %v1364
    %v1368 = vsel %vm1146, %v1340, 0
    %v1371 = vsel %vm1146, %v1341, 0
    %v1374 = vsel %vm1146, %v1342, 0
    %v1377 = vsel %vm1146, %v1343, 0
    %v1380 = vsel %vm1146, %v1344, 0
    %v1383 = vsel %vm1146, %v1345, 0
    %v1386 = vsel %vm1146, %v1346, 0
    %v1389 = vsel %vm1146, %v1347, 0
    %v1392 = vsel %vm1146, %v1348, 0
    %v1395 = vsel %vm1146, %v1349, 0
    %v1398 = vsel %vm1146, %v1350, 0
    %v1401 = vsel %vm1146, %v1351, 0
    %v1404 = vsel %vm1146, %v1352, 0
    %v1407 = vsel %vm1146, %v1353, 0
    %v1410 = vsel %vm1146, %v1354, 0
    %v1413 = vsel %vm1146, %v1355, 0
    %1415 = vmatprep.subr.mxu0 0.0
    %1416 = vmatpush1.msra.mxu0 %v1356
    %1417 = vmatprep.subr.mxu0 0.0
    %1418 = vmatpush1.msra.mxu0 %v1357
    %1419 = vmatprep.subr.mxu0 0.0
    %1420 = vmatpush1.msra.mxu0 %v1358
    %1421 = vmatprep.subr.mxu0 0.0
    %1422 = vmatpush1.msra.mxu0 %v1359
    %1423 = vmatprep.subr.mxu0 0.0
    %1424 = vmatpush1.msra.mxu0 0.0
    %1425 = vmatprep.subr.mxu0 0.0
    %1426 = vmatpush1.msra.mxu0 0.0
    %1427 = vmatprep.subr.mxu0 0.0
    %1428 = vmatpush1.msra.mxu0 0.0
    %1429 = vmatprep.subr.mxu0 0.0
    %1430 = vmatpush1.msra.mxu0 0.0
    %1431 = vmatprep.subr.mxu0 0.0
    %1432 = vmatpush1.msra.mxu0 0.0
    %1433 = vmatprep.subr.mxu0 0.0
    %1434 = vmatpush1.msra.mxu0 0.0
    %1435 = vmatprep.subr.mxu0 0.0
    %1436 = vmatpush1.msra.mxu0 0.0
    %1437 = vmatprep.subr.mxu0 0.0
    %1438 = vmatpush1.msra.mxu0 0.0
    %1439 = vmatprep.subr.mxu0 0.0
    %1440 = vmatpush1.msra.mxu0 0.0
    %1441 = vmatprep.subr.mxu0 0.0
    %1442 = vmatpush1.msra.mxu0 0.0
    %1443 = vmatprep.subr.mxu0 0.0
    %1444 = vmatpush1.msra.mxu0 0.0
    %1445 = vmatprep.subr.mxu0 0.0
    %1446 = vmatpush1.msra.mxu0 0.0
    %1447 = vmatprep.subr.mxu0 0.0
    %1448 = vmatpush1.msra.mxu0 0.0
    %1449 = vmatprep.subr.mxu0 0.0
    %1450 = vmatpush1.msra.mxu0 0.0
    %1451 = vmatprep.subr.mxu0 0.0
    %1452 = vmatpush1.msra.mxu0 0.0
    %1453 = vmatprep.subr.mxu0 0.0
    %1454 = vmatpush1.msra.mxu0 0.0
    %1455 = vmatprep.subr.mxu0 0.0
    %1456 = vmatpush1.msra.mxu0 0.0
    %1457 = vmatprep.subr.mxu0 0.0
    %1458 = vmatpush1.msra.mxu0 0.0
    %1459 = vmatprep.subr.mxu0 0.0
    %1460 = vmatpush1.msra.mxu0 0.0
    %1461 = vmatprep.subr.mxu0 0.0
    %1462 = vmatpush1.msra.mxu0 0.0
    %1463 = vmatprep.subr.mxu0 0.0
    %1464 = vmatpush1.msra.mxu0 0.0
    %1465 = vmatprep.subr.mxu0 0.0
    %1466 = vmatpush1.msra.mxu0 0.0
    %1467 = vmatprep.subr.mxu0 0.0
    %1468 = vmatpush1.msra.mxu0 0.0
    %1469 = vmatprep.subr.mxu0 0.0
    %1470 = vmatpush1.msra.mxu0 0.0
    %1471 = vmatprep.subr.mxu0 0.0
    %1472 = vmatpush1.msra.mxu0 0.0
    %1473 = vmatprep.subr.mxu0 0.0
    %1474 = vmatpush1.msra.mxu0 0.0
    %1475 = vmatprep.subr.mxu0 0.0
    %1476 = vmatpush1.msra.mxu0 0.0
    %1477 = vmatprep.subr.mxu0 0.0
    %1478 = vmatpush1.msra.mxu0 0.0
    %1479 = vmatprep.mubr.f32.mxu0 0.0
    %1480 = vmatmul.mubr.f32.gmra.mrb[0].mxu0 %v1368
    %v1481 = vpop.f32.mrb[0].mxu0
    %v1482 = vadd.f32 %v1365, %v1481
    %v1483 = vpop.f32.mrb[0].mxu0
    %1484 = vmatprep.mubr.f32.mxu0 0.0
    %1485 = vmatmul.mubr.f32.gmra.mrb[0].mxu0 %v1371
    %v1486 = vpop.f32.mrb[0].mxu0
    %v1487 = vadd.f32 %v1365, %v1486
    %v1488 = vpop.f32.mrb[0].mxu0
    %1489 = vmatprep.mubr.f32.mxu0 0.0
    %1490 = vmatmul.mubr.f32.gmra.mrb[0].mxu0 %v1374
    %v1491 = vpop.f32.mrb[0].mxu0
    %v1492 = vadd.f32 %v1365, %v1491
    %v1493 = vpop.f32.mrb[0].mxu0
    %1494 = vmatprep.mubr.f32.mxu0 0.0
    %1495 = vmatmul.mubr.f32.gmra.mrb[0].mxu0 %v1377
    %v1496 = vpop.f32.mrb[0].mxu0
    %v1497 = vadd.f32 %v1365, %v1496
    %v1498 = vpop.f32.mrb[0].mxu0
    %1499 = vmatprep.mubr.f32.mxu0 0.0
    %1500 = vmatmul.mubr.f32.gmra.mrb[0].mxu0 %v1380
    %v1501 = vpop.f32.mrb[0].mxu0
    %v1502 = vadd.f32 %v1365, %v1501
    %v1503 = vpop.f32.mrb[0].mxu0
    %1504 = vmatprep.mubr.f32.mxu0 0.0
    %1505 = vmatmul.mubr.f32.gmra.mrb[0].mxu0 %v1383
    %v1506 = vpop.f32.mrb[0].mxu0
    %v1507 = vadd.f32 %v1365, %v1506
    %v1508 = vpop.f32.mrb[0].mxu0
    %1509 = vmatprep.mubr.f32.mxu0 0.0
    %1510 = vmatmul.mubr.f32.gmra.mrb[0].mxu0 %v1386
    %v1511 = vpop.f32.mrb[0].mxu0
    %v1512 = vadd.f32 %v1365, %v1511
    %v1513 = vpop.f32.mrb[0].mxu0
    %1514 = vmatprep.mubr.f32.mxu0 0.0
    %1515 = vmatmul.mubr.f32.gmra.mrb[0].mxu0 %v1389
    %v1516 = vpop.f32.mrb[0].mxu0
    %v1517 = vadd.f32 %v1365, %v1516
    %v1518 = vpop.f32.mrb[0].mxu0
    %1519 = vmatprep.mubr.f32.mxu0 0.0
    %1520 = vmatmul.mubr.f32.gmra.mrb[0].mxu0 %v1392
    %v1521 = vpop.f32.mrb[0].mxu0
    %v1522 = vadd.f32 %v1365, %v1521
    %v1523 = vpop.f32.mrb[0].mxu0
    %1524 = vmatprep.mubr.f32.mxu0 0.0
    %1525 = vmatmul.mubr.f32.gmra.mrb[0].mxu0 %v1395
    %v1526 = vpop.f32.mrb[0].mxu0
    %v1527 = vadd.f32 %v1365, %v1526
    %v1528 = vpop.f32.mrb[0].mxu0
    %1529 = vmatprep.mubr.f32.mxu0 0.0
    %1530 = vmatmul.mubr.f32.gmra.mrb[0].mxu0 %v1398
    %v1531 = vpop.f32.mrb[0].mxu0
    %v1532 = vadd.f32 %v1365, %v1531
    %v1533 = vpop.f32.mrb[0].mxu0
    %1534 = vmatprep.mubr.f32.mxu0 0.0
    %1535 = vmatmul.mubr.f32.gmra.mrb[0].mxu0 %v1401
    %v1536 = vpop.f32.mrb[0].mxu0
    %v1537 = vadd.f32 %v1365, %v1536
    %v1538 = vpop.f32.mrb[0].mxu0
    %1539 = vmatprep.mubr.f32.mxu0 0.0
    %1540 = vmatmul.mubr.f32.gmra.mrb[0].mxu0 %v1404
    %v1541 = vpop.f32.mrb[0].mxu0
    %v1542 = vadd.f32 %v1365, %v1541
    %v1543 = vpop.f32.mrb[0].mxu0
    %1544 = vmatprep.mubr.f32.mxu0 0.0
    %1545 = vmatmul.mubr.f32.gmra.mrb[0].mxu0 %v1407
    %v1546 = vpop.f32.mrb[0].mxu0
    %v1547 = vadd.f32 %v1365, %v1546
    %v1548 = vpop.f32.mrb[0].mxu0
    %1549 = vmatprep.mubr.f32.mxu0 0.0
    %1550 = vmatmul.mubr.f32.gmra.mrb[0].mxu0 %v1410
    %v1551 = vpop.f32.mrb[0].mxu0
    %v1552 = vadd.f32 %v1365, %v1551
    %v1553 = vpop.f32.mrb[0].mxu0
    %1554 = vmatprep.mubr.f32.mxu0 0.0
    %1555 = vmatmul.mubr.f32.gmra.mrb[0].mxu0 %v1413
    %v1556 = vpop.f32.mrb[0].mxu0
    %v1557 = vadd.f32 %v1365, %v1556
    %v1558 = vpop.f32.mrb[0].mxu0
    %1559 = vdwg.mxu0
    %v1560 = vmul.f32 %v47, %v47
    %v1561 = vmul.f32 %v48, %v48
    %v1562 = vmul.f32 %v49, %v49
    %v1563 = vmul.f32 %v50, %v50
    %v1564 = vmul.f32 %v51, %v51
    %v1565 = vmul.f32 %v52, %v52
    %v1566 = vmul.f32 %v53, %v53
    %v1567 = vmul.f32 %v54, %v54
    %v1568 = vmul.f32 %v55, %v55
    %v1569 = vmul.f32 %v56, %v56
    %v1570 = vmul.f32 %v57, %v57
    %v1571 = vmul.f32 %v58, %v58
    %v1572 = vmul.f32 %v59, %v59
    %v1573 = vmul.f32 %v60, %v60
    %v1574 = vmul.f32 %v61, %v61
    %v1575 = vmul.f32 %v62, %v62
    %v1576 = vsel %vm71, %v1560, 0.0
    %1577 = vadd.xlane.f32.xlu0 %v1576
    %v1578 = vpop.xlane.xlu0 %1577
    %v1579 = vsel %vm71, %v1561, 0.0
    %1580 = vadd.xlane.f32.xlu0 %v1579
    %v1581 = vpop.xlane.xlu0 %1580
    %v1582 = vsel %vm71, %v1562, 0.0
    %1583 = vadd.xlane.f32.xlu0 %v1582
    %v1584 = vpop.xlane.xlu0 %1583
    %v1585 = vsel %vm71, %v1563, 0.0
    %1586 = vadd.xlane.f32.xlu0 %v1585
    %v1587 = vpop.xlane.xlu0 %1586
    %v1588 = vsel %vm71, %v1564, 0.0
    %1589 = vadd.xlane.f32.xlu0 %v1588
    %v1590 = vpop.xlane.xlu0 %1589
    %v1591 = vsel %vm71, %v1565, 0.0
    %1592 = vadd.xlane.f32.xlu0 %v1591
    %v1593 = vpop.xlane.xlu0 %1592
    %v1594 = vsel %vm71, %v1566, 0.0
    %1595 = vadd.xlane.f32.xlu0 %v1594
    %v1596 = vpop.xlane.xlu0 %1595
    %v1597 = vsel %vm71, %v1567, 0.0
    %1598 = vadd.xlane.f32.xlu0 %v1597
    %v1599 = vpop.xlane.xlu0 %1598
    %v1600 = vsel %vm71, %v1568, 0.0
    %1601 = vadd.xlane.f32.xlu0 %v1600
    %v1602 = vpop.xlane.xlu0 %1601
    %v1603 = vsel %vm71, %v1569, 0.0
    %1604 = vadd.xlane.f32.xlu0 %v1603
    %v1605 = vpop.xlane.xlu0 %1604
    %v1606 = vsel %vm71, %v1570, 0.0
    %1607 = vadd.xlane.f32.xlu0 %v1606
    %v1608 = vpop.xlane.xlu0 %1607
    %v1609 = vsel %vm71, %v1571, 0.0
    %1610 = vadd.xlane.f32.xlu0 %v1609
    %v1611 = vpop.xlane.xlu0 %1610
    %v1612 = vsel %vm71, %v1572, 0.0
    %1613 = vadd.xlane.f32.xlu0 %v1612
    %v1614 = vpop.xlane.xlu0 %1613
    %v1615 = vsel %vm71, %v1573, 0.0
    %1616 = vadd.xlane.f32.xlu0 %v1615
    %v1617 = vpop.xlane.xlu0 %1616
    %v1618 = vsel %vm71, %v1574, 0.0
    %1619 = vadd.xlane.f32.xlu0 %v1618
    %v1620 = vpop.xlane.xlu0 %1619
    %v1621 = vsel %vm71, %v1575, 0.0
    %1622 = vadd.xlane.f32.xlu0 %v1621
    %v1623 = vpop.xlane.xlu0 %1622
    %v1624 = vld [vmem:[%s1] sm:$0x1]
    %v1626 = vlaneseq
    %v1627 = vshrl.u32 %v1626, 7
    %v1628 = vsub.s32 0, %v1627
    %v1629 = vrot.slane %v1624, %v1628
    %v1631 = vsub.f32 %v947, %v1629
    %v1632 = vsub.f32 %v948, %v1629
    %v1633 = vsub.f32 %v949, %v1629
    %v1634 = vsub.f32 %v950, %v1629
    %v1635 = vsub.f32 %v951, %v1629
    %v1636 = vsub.f32 %v952, %v1629
    %v1637 = vsub.f32 %v953, %v1629
    %v1638 = vsub.f32 %v954, %v1629
    %v1639 = vsub.f32 %v955, %v1629
    %v1640 = vsub.f32 %v956, %v1629
    %v1641 = vsub.f32 %v957, %v1629
    %v1642 = vsub.f32 %v958, %v1629
    %v1643 = vsub.f32 %v959, %v1629
    %v1644 = vsub.f32 %v960, %v1629
    %v1645 = vsub.f32 %v961, %v1629
    %v1646 = vsub.f32 %v962, %v1629
    %v1647 = vmax.f32 %v1631, 0.0
    %v1648 = vmax.f32 %v1632, 0.0
    %v1649 = vmax.f32 %v1633, 0.0
    %v1650 = vmax.f32 %v1634, 0.0
    %v1651 = vmax.f32 %v1635, 0.0
    %v1652 = vmax.f32 %v1636, 0.0
    %v1653 = vmax.f32 %v1637, 0.0
    %v1654 = vmax.f32 %v1638, 0.0
    %v1655 = vmax.f32 %v1639, 0.0
    %v1656 = vmax.f32 %v1640, 0.0
    %v1657 = vmax.f32 %v1641, 0.0
    %v1658 = vmax.f32 %v1642, 0.0
    %v1659 = vmax.f32 %v1643, 0.0
    %v1660 = vmax.f32 %v1644, 0.0
    %v1661 = vmax.f32 %v1645, 0.0
    %v1662 = vmax.f32 %v1646, 0.0
    %v1663 = vmul.f32 %v1647, %v1647
    %v1664 = vmul.f32 %v1648, %v1648
    %v1665 = vmul.f32 %v1649, %v1649
    %v1666 = vmul.f32 %v1650, %v1650
    %v1667 = vmul.f32 %v1651, %v1651
    %v1668 = vmul.f32 %v1652, %v1652
    %v1669 = vmul.f32 %v1653, %v1653
    %v1670 = vmul.f32 %v1654, %v1654
    %v1671 = vmul.f32 %v1655, %v1655
    %v1672 = vmul.f32 %v1656, %v1656
    %v1673 = vmul.f32 %v1657, %v1657
    %v1674 = vmul.f32 %v1658, %v1658
    %v1675 = vmul.f32 %v1659, %v1659
    %v1676 = vmul.f32 %v1660, %v1660
    %v1677 = vmul.f32 %v1661, %v1661
    %v1678 = vmul.f32 %v1662, %v1662
    %v1679 = vmul.f32 %v1663, 0.2
    %v1680 = vmul.f32 %v1664, 0.2
    %v1681 = vmul.f32 %v1665, 0.2
    %v1682 = vmul.f32 %v1666, 0.2
    %v1683 = vmul.f32 %v1667, 0.2
    %v1684 = vmul.f32 %v1668, 0.2
    %v1685 = vmul.f32 %v1669, 0.2
    %v1686 = vmul.f32 %v1670, 0.2
    %v1687 = vmul.f32 %v1671, 0.2
    %v1688 = vmul.f32 %v1672, 0.2
    %v1689 = vmul.f32 %v1673, 0.2
    %v1690 = vmul.f32 %v1674, 0.2
    %v1691 = vmul.f32 %v1675, 0.2
    %v1692 = vmul.f32 %v1676, 0.2
    %v1693 = vmul.f32 %v1677, 0.2
    %v1694 = vmul.f32 %v1678, 0.2
    %v1695 = vmul.f32 %v1679, %v1647
    %v1696 = vmul.f32 %v1680, %v1648
    %v1697 = vmul.f32 %v1681, %v1649
    %v1698 = vmul.f32 %v1682, %v1650
    %v1699 = vmul.f32 %v1683, %v1651
    %v1700 = vmul.f32 %v1684, %v1652
    %v1701 = vmul.f32 %v1685, %v1653
    %v1702 = vmul.f32 %v1686, %v1654
    %v1703 = vmul.f32 %v1687, %v1655
    %v1704 = vmul.f32 %v1688, %v1656
    %v1705 = vmul.f32 %v1689, %v1657
    %v1706 = vmul.f32 %v1690, %v1658
    %v1707 = vmul.f32 %v1691, %v1659
    %v1708 = vmul.f32 %v1692, %v1660
    %v1709 = vmul.f32 %v1693, %v1661
    %v1710 = vmul.f32 %v1694, %v1662
    %v1711 = vmul.f32 %v1663, %v1663
    %v1712 = vmul.f32 %v1664, %v1664
    %v1713 = vmul.f32 %v1665, %v1665
    %v1714 = vmul.f32 %v1666, %v1666
    %v1715 = vmul.f32 %v1667, %v1667
    %v1716 = vmul.f32 %v1668, %v1668
    %v1717 = vmul.f32 %v1669, %v1669
    %v1718 = vmul.f32 %v1670, %v1670
    %v1719 = vmul.f32 %v1671, %v1671
    %v1720 = vmul.f32 %v1672, %v1672
    %v1721 = vmul.f32 %v1673, %v1673
    %v1722 = vmul.f32 %v1674, %v1674
    %v1723 = vmul.f32 %v1675, %v1675
    %v1724 = vmul.f32 %v1676, %v1676
    %v1725 = vmul.f32 %v1677, %v1677
    %v1726 = vmul.f32 %v1678, %v1678
    %v1727 = vsub.f32 %v1695, %v1711
    %v1728 = vsub.f32 %v1696, %v1712
    %v1729 = vsub.f32 %v1697, %v1713
    %v1730 = vsub.f32 %v1698, %v1714
    %v1731 = vsub.f32 %v1699, %v1715
    %v1732 = vsub.f32 %v1700, %v1716
    %v1733 = vsub.f32 %v1701, %v1717
    %v1734 = vsub.f32 %v1702, %v1718
    %v1735 = vsub.f32 %v1703, %v1719
    %v1736 = vsub.f32 %v1704, %v1720
    %v1737 = vsub.f32 %v1705, %v1721
    %v1738 = vsub.f32 %v1706, %v1722
    %v1739 = vsub.f32 %v1707, %v1723
    %v1740 = vsub.f32 %v1708, %v1724
    %v1741 = vsub.f32 %v1709, %v1725
    %v1742 = vsub.f32 %v1710, %v1726
    %v1743 = vmul.f32 %v1727, 500.0
    %v1744 = vmul.f32 %v1728, 500.0
    %v1745 = vmul.f32 %v1729, 500.0
    %v1746 = vmul.f32 %v1730, 500.0
    %v1747 = vmul.f32 %v1731, 500.0
    %v1748 = vmul.f32 %v1732, 500.0
    %v1749 = vmul.f32 %v1733, 500.0
    %v1750 = vmul.f32 %v1734, 500.0
    %v1751 = vmul.f32 %v1735, 500.0
    %v1752 = vmul.f32 %v1736, 500.0
    %v1753 = vmul.f32 %v1737, 500.0
    %v1754 = vmul.f32 %v1738, 500.0
    %v1755 = vmul.f32 %v1739, 500.0
    %v1756 = vmul.f32 %v1740, 500.0
    %v1757 = vmul.f32 %v1741, 500.0
    %v1758 = vmul.f32 %v1742, 500.0
    %v1759 = vsub.f32 %v1631, 0.05
    %v1760 = vsub.f32 %v1632, 0.05
    %v1761 = vsub.f32 %v1633, 0.05
    %v1762 = vsub.f32 %v1634, 0.05
    %v1763 = vsub.f32 %v1635, 0.05
    %v1764 = vsub.f32 %v1636, 0.05
    %v1765 = vsub.f32 %v1637, 0.05
    %v1766 = vsub.f32 %v1638, 0.05
    %v1767 = vsub.f32 %v1639, 0.05
    %v1768 = vsub.f32 %v1640, 0.05
    %v1769 = vsub.f32 %v1641, 0.05
    %v1770 = vsub.f32 %v1642, 0.05
    %v1771 = vsub.f32 %v1643, 0.05
    %v1772 = vsub.f32 %v1644, 0.05
    %v1773 = vsub.f32 %v1645, 0.05
    %v1774 = vsub.f32 %v1646, 0.05
    %vm1775 = vcmp.lt.f32.partialorder %v1647, 0.1
    %vm1776 = vcmp.lt.f32.partialorder %v1648, 0.1
    %vm1777 = vcmp.lt.f32.partialorder %v1649, 0.1
    %vm1778 = vcmp.lt.f32.partialorder %v1650, 0.1
    %vm1779 = vcmp.lt.f32.partialorder %v1651, 0.1
    %vm1780 = vcmp.lt.f32.partialorder %v1652, 0.1
    %vm1781 = vcmp.lt.f32.partialorder %v1653, 0.1
    %vm1782 = vcmp.lt.f32.partialorder %v1654, 0.1
    %vm1783 = vcmp.lt.f32.partialorder %v1655, 0.1
    %vm1784 = vcmp.lt.f32.partialorder %v1656, 0.1
    %vm1785 = vcmp.lt.f32.partialorder %v1657, 0.1
    %vm1786 = vcmp.lt.f32.partialorder %v1658, 0.1
    %vm1787 = vcmp.lt.f32.partialorder %v1659, 0.1
    %vm1788 = vcmp.lt.f32.partialorder %v1660, 0.1
    %vm1789 = vcmp.lt.f32.partialorder %v1661, 0.1
    %vm1790 = vcmp.lt.f32.partialorder %v1662, 0.1
    %v1791 = vsel %vm1775, %v1743, %v1759
    %v1792 = vsel %vm1776, %v1744, %v1760
    %v1793 = vsel %vm1777, %v1745, %v1761
    %v1794 = vsel %vm1778, %v1746, %v1762
    %v1795 = vsel %vm1779, %v1747, %v1763
    %v1796 = vsel %vm1780, %v1748, %v1764
    %v1797 = vsel %vm1781, %v1749, %v1765
    %v1798 = vsel %vm1782, %v1750, %v1766
    %v1799 = vsel %vm1783, %v1751, %v1767
    %v1800 = vsel %vm1784, %v1752, %v1768
    %v1801 = vsel %vm1785, %v1753, %v1769
    %v1802 = vsel %vm1786, %v1754, %v1770
    %v1803 = vsel %vm1787, %v1755, %v1771
    %v1804 = vsel %vm1788, %v1756, %v1772
    %v1805 = vsel %vm1789, %v1757, %v1773
    %v1806 = vsel %vm1790, %v1758, %v1774
    %v1807 = vmul.f32 %v1578, 0.001
    %v1808 = vmul.f32 %v1581, 0.001
    %v1809 = vmul.f32 %v1584, 0.001
    %v1810 = vmul.f32 %v1587, 0.001
    %v1811 = vmul.f32 %v1590, 0.001
    %v1812 = vmul.f32 %v1593, 0.001
    %v1813 = vmul.f32 %v1596, 0.001
    %v1814 = vmul.f32 %v1599, 0.001
    %v1815 = vmul.f32 %v1602, 0.001
    %v1816 = vmul.f32 %v1605, 0.001
    %v1817 = vmul.f32 %v1608, 0.001
    %v1818 = vmul.f32 %v1611, 0.001
    %v1819 = vmul.f32 %v1614, 0.001
    %v1820 = vmul.f32 %v1617, 0.001
    %v1821 = vmul.f32 %v1620, 0.001
    %v1822 = vmul.f32 %v1623, 0.001
    %v1823 = vadd.f32 %v1791, %v1807
    %v1824 = vadd.f32 %v1792, %v1808
    %v1825 = vadd.f32 %v1793, %v1809
    %v1826 = vadd.f32 %v1794, %v1810
    %v1827 = vadd.f32 %v1795, %v1811
    %v1828 = vadd.f32 %v1796, %v1812
    %v1829 = vadd.f32 %v1797, %v1813
    %v1830 = vadd.f32 %v1798, %v1814
    %v1831 = vadd.f32 %v1799, %v1815
    %v1832 = vadd.f32 %v1800, %v1816
    %v1833 = vadd.f32 %v1801, %v1817
    %v1834 = vadd.f32 %v1802, %v1818
    %v1835 = vadd.f32 %v1803, %v1819
    %v1836 = vadd.f32 %v1804, %v1820
    %v1837 = vadd.f32 %v1805, %v1821
    %v1838 = vadd.f32 %v1806, %v1822
    %1839 = vxpose.xlu0.b32.start [1/16] %v1823, 128
    %1840 = vxpose.xlu0.b32.cont [2/16] %v1824, 128
    %1841 = vxpose.xlu0.b32.cont [3/16] %v1825, 128
    %1842 = vxpose.xlu0.b32.cont [4/16] %v1826, 128
    %1843 = vxpose.xlu0.b32.cont [5/16] %v1827, 128
    %1844 = vxpose.xlu0.b32.cont [6/16] %v1828, 128
    %1845 = vxpose.xlu0.b32.cont [7/16] %v1829, 128
    %1846 = vxpose.xlu0.b32.cont [8/16] %v1830, 128
    %1847 = vxpose.xlu0.b32.cont [9/16] %v1831, 128
    %1848 = vxpose.xlu0.b32.cont [10/16] %v1832, 128
    %1849 = vxpose.xlu0.b32.cont [11/16] %v1833, 128
    %1850 = vxpose.xlu0.b32.cont [12/16] %v1834, 128
    %1851 = vxpose.xlu0.b32.cont [13/16] %v1835, 128
    %1852 = vxpose.xlu0.b32.cont [14/16] %v1836, 128
    %1853 = vxpose.xlu0.b32.cont [15/16] %v1837, 128
    %1854 = vxpose.xlu0.b32.end [16/16] %v1838, 128
    %v1855 = vpop.trf.xlu0
    %v1856 = vpop.trf.xlu0
    %v1857 = vpop.trf.xlu0
    %v1858 = vpop.trf.xlu0
    %v1859 = vpop.trf.xlu0
    %v1860 = vpop.trf.xlu0
    %v1861 = vpop.trf.xlu0
    %v1862 = vpop.trf.xlu0
    %v1863 = vpop.trf.xlu0
    %v1864 = vpop.trf.xlu0
    %v1865 = vpop.trf.xlu0
    %v1866 = vpop.trf.xlu0
    %v1867 = vpop.trf.xlu0
    %v1868 = vpop.trf.xlu0
    %v1869 = vpop.trf.xlu0
    %v1870 = vpop.trf.xlu0
    %1871 = vst [vmem:[#allocation2] sm:$0xff] %v1855
    %1872 = vst [vmem:[#allocation2 + $0x8] sm:$0xff] %v1856
    %1873 = vst [vmem:[#allocation2 + $0x10] sm:$0xff] %v1857
    %1874 = vst [vmem:[#allocation2 + $0x18] sm:$0xff] %v1858
    %1875 = vst [vmem:[#allocation2 + $0x20] sm:$0xff] %v1859
    %1876 = vst [vmem:[#allocation2 + $0x28] sm:$0xff] %v1860
    %1877 = vst [vmem:[#allocation2 + $0x30] sm:$0xff] %v1861
    %1878 = vst [vmem:[#allocation2 + $0x38] sm:$0xff] %v1862
    %v1879 = vmul.f32 %v1482, %v47
    %v1880 = vmul.f32 %v1487, %v48
    %v1881 = vmul.f32 %v1492, %v49
    %v1882 = vmul.f32 %v1497, %v50
    %v1883 = vmul.f32 %v1502, %v51
    %v1884 = vmul.f32 %v1507, %v52
    %v1885 = vmul.f32 %v1512, %v53
    %v1886 = vmul.f32 %v1517, %v54
    %v1887 = vmul.f32 %v1522, %v55
    %v1888 = vmul.f32 %v1527, %v56
    %v1889 = vmul.f32 %v1532, %v57
    %v1890 = vmul.f32 %v1537, %v58
    %v1891 = vmul.f32 %v1542, %v59
    %v1892 = vmul.f32 %v1547, %v60
    %v1893 = vmul.f32 %v1552, %v61
    %v1894 = vmul.f32 %v1557, %v62
    %1895 = vst.msk [vmem:[%s14] sm:$0xff] %vm71, %v1879
    %1896 = vst.msk [vmem:[%s14 + $0x8] sm:$0xff] %vm71, %v1880
    %1897 = vst.msk [vmem:[%s14 + $0x10] sm:$0xff] %vm71, %v1881
    %1898 = vst.msk [vmem:[%s14 + $0x18] sm:$0xff] %vm71, %v1882
    %1899 = vst.msk [vmem:[%s14 + $0x20] sm:$0xff] %vm71, %v1883
    %1900 = vst.msk [vmem:[%s14 + $0x28] sm:$0xff] %vm71, %v1884
    %1901 = vst.msk [vmem:[%s14 + $0x30] sm:$0xff] %vm71, %v1885
    %1902 = vst.msk [vmem:[%s14 + $0x38] sm:$0xff] %vm71, %v1886
    %1903 = vst.msk [vmem:[%s14 + $0x40] sm:$0xff] %vm71, %v1887
    %1904 = vst.msk [vmem:[%s14 + $0x48] sm:$0xff] %vm71, %v1888
    %1905 = vst.msk [vmem:[%s14 + $0x50] sm:$0xff] %vm71, %v1889
    %1906 = vst.msk [vmem:[%s14 + $0x58] sm:$0xff] %vm71, %v1890
    %1907 = vst.msk [vmem:[%s14 + $0x60] sm:$0xff] %vm71, %v1891
    %1908 = vst.msk [vmem:[%s14 + $0x68] sm:$0xff] %vm71, %v1892
    %1909 = vst.msk [vmem:[%s14 + $0x70] sm:$0xff] %vm71, %v1893
    %1910 = vst.msk [vmem:[%s14 + $0x78] sm:$0xff] %vm71, %v1894
    // Predicated region
    $region54: #{tpu_custom_call.1} parent=1 // pred_check
      _
    $region55: #{tpu_custom_call.1} parent=1 // pred_check_branch
      %1912 = sbr.rel (0) target = $region57
    $region56: #{tpu_custom_call.1} parent=1 // pred_region
      %s1914 = ssub.s32 1024, 1024
      %1915 = vsyncadd [#allocation3], %s1914
      %s1916 = sshll.u32 [#allocation2], 4
      %s1917 = int_to_ptr.vmem [resolvable:$true] %s1916
      %1922 = dma.vmem_to_hbm [thread:$0]  %s1917, 1024, %s13, [#allocation3], 128, 128, 8
    $region57: #{tpu_custom_call.1} parent=1 // pred_fallthru
      _
    // Predicated region
    $region58: #{tpu_custom_call.1} parent=1 // pred_check
      _
    $region59: #{tpu_custom_call.1} parent=1 // pred_check_branch
      %1924 = sbr.rel (0) target = $region61
    $region60: #{tpu_custom_call.1} parent=1 // pred_region
      _
    $region61: #{tpu_custom_call.1} parent=1 // pred_fallthru
      _
    // Predicated region
    $region62: #{tpu_custom_call.1} parent=1 // pred_check
      _
    $region63: #{tpu_custom_call.1} parent=1 // pred_check_branch
      %1926 = sbr.rel (0) target = $region65
    $region64: #{tpu_custom_call.1} parent=1 // pred_region
      %1927 = dma.done [#allocation3], 1024
    $region65: #{tpu_custom_call.1} parent=1 // pred_fallthru
      _
    // Predicated region
    $region66: #{tpu_custom_call.1} parent=1 // pred_check
      _
    $region67: #{tpu_custom_call.1} parent=1 // pred_check_branch
      %1929 = sbr.rel (0) target = $region69
    $region68: #{tpu_custom_call.1} parent=1 // pred_region
      _
    $region69: #{tpu_custom_call.1} parent=1 // pred_fallthru
      _
    %1930 = vsyncpa [#allocation3], 1

</llo_original>
